<compile_context>
chip_gen: v5e
topology: v5e:2x2
jax: 0.10.0
libtpu: 0.0.40
codegen_flags: <defaults>
</compile_context>

<pallas_src>
import jax
import jax.numpy as jnp
from jax import lax
from jax.experimental import pallas as pl
from jax.experimental.pallas import tpu as pltpu


def _make_nonlocal_kernel(compute_dtype):
    def kernel(x_ref, wphi_ref, wtheta_ref, wg_ref, wmask_ref, out_ref):
        bt, c, hw = x_ref.shape
        n = hw // 2                      # spatial length after the .view "bug"

        wphi = wphi_ref[...].astype(compute_dtype)     # (C/2, C)
        wtheta = wtheta_ref[...].astype(compute_dtype)  # (C/2, C)
        wg = wg_ref[...].astype(compute_dtype)          # (C/2, C)
        wmask = wmask_ref[...].astype(compute_dtype)    # (C,  C/2)

        # Static unrolled loop over the batch tile (bt is a compile-time const).
        for b in range(bt):
            xb = x_ref[b]                                # (C, HW) f32
            xc = xb.astype(compute_dtype)

            # 1x1 convs == channel matmuls on the MXU, f32 accumulation.
            phi = jnp.dot(wphi, xc, preferred_element_type=jnp.float32)    # (C/2, HW)
            theta = jnp.dot(wtheta, xc, preferred_element_type=jnp.float32)
            g = jnp.dot(wg, xc, preferred_element_type=jnp.float32)

            # Lane-aligned split at N (replaces the (C/2,HW)->(C,HW/2) reshape).
            th_lo = theta[:, :n].astype(compute_dtype)
            th_hi = theta[:, n:].astype(compute_dtype)
            ph_lo = phi[:, :n].astype(compute_dtype)
            ph_hi = phi[:, n:].astype(compute_dtype)

            # attn = theta_r^T @ phi_r   -> (N, N)
            attn = lax.dot_general(th_lo, ph_lo, (((0,), (0,)), ((), ())),
                                   preferred_element_type=jnp.float32)
            attn = attn + lax.dot_general(th_hi, ph_hi, (((0,), (0,)), ((), ())),
                                          preferred_element_type=jnp.float32)

            # softmax over dim=1 of (b, N, N) == axis 0 of the per-batch matrix
            m = jnp.max(attn, axis=0, keepdims=True)
            e = jnp.exp(attn - m)
            s = jnp.sum(e, axis=0, keepdims=True)
            attn_sm = (e * pl.reciprocal(s, approx=True)).astype(compute_dtype)

            # out_ci[:, :N] = g[:, :N] @ attn_sm^T ; out_ci[:, N:] = g[:, N:] @ attn_sm^T
            g_lo = g[:, :n].astype(compute_dtype)
            g_hi = g[:, n:].astype(compute_dtype)
            out_lo = lax.dot_general(g_lo, attn_sm, (((1,), (1,)), ((), ())),
                                     preferred_element_type=jnp.float32)     # (C/2, N)
            out_hi = lax.dot_general(g_hi, attn_sm, (((1,), (1,)), ((), ())),
                                     preferred_element_type=jnp.float32)     # (C/2, N)

            # conv_mask (1x1, C/2 -> C) + residual, written as two lane slices.
            mask_lo = jnp.dot(wmask, out_lo.astype(compute_dtype),
                              preferred_element_type=jnp.float32)            # (C, N)
            mask_hi = jnp.dot(wmask, out_hi.astype(compute_dtype),
                              preferred_element_type=jnp.float32)            # (C, N)

            out_ref[b, :, 0:n] = (mask_lo + xb[:, :n]).astype(out_ref.dtype)
            out_ref[b, :, n:hw] = (mask_hi + xb[:, n:]).astype(out_ref.dtype)

    return kernel


def nonlocal_block_forward(x, w_phi, w_theta, w_g, w_mask,
                           *, compute_dtype=jnp.float32, batch_tile=None):
    """Pallas forward of NonLocalBlockND. x: (B, C, H, W) float."""
    b, c, h, w = x.shape
    assert c % 2 == 0, "NonLocalBlockND requires an even channel count"
    hw = h * w
    assert hw % 2 == 0
    # (best perf when hw is a multiple of 256 so the N = hw/2 split is lane-aligned)

    if batch_tile is None:
        batch_tile = 1
        for d in range(min(b, 8), 0, -1):   # largest divisor of B up to 8
            if b % d == 0:
                batch_tile = d
                break
    assert b % batch_tile == 0

    xr = x.reshape(b, c, hw).astype(jnp.float32)
    wp = w_phi.astype(jnp.float32)
    wt = w_theta.astype(jnp.float32)
    wg = w_g.astype(jnp.float32)
    wm = w_mask.astype(jnp.float32)

    grid = (b // batch_tile,)
    in_specs = [
        pl.BlockSpec((batch_tile, c, hw), lambda i: (i, 0, 0)),   # x
        pl.BlockSpec(wp.shape, lambda i: (0, 0)),                 # w_phi
        pl.BlockSpec(wt.shape, lambda i: (0, 0)),                 # w_theta
        pl.BlockSpec(wg.shape, lambda i: (0, 0)),                 # w_g
        pl.BlockSpec(wm.shape, lambda i: (0, 0)),                 # w_mask
    ]
    out_spec = pl.BlockSpec((batch_tile, c, hw), lambda i: (i, 0, 0))

    out = pl.pallas_call(
        _make_nonlocal_kernel(compute_dtype),
        grid=grid,
        in_specs=in_specs,
        out_specs=out_spec,
        out_shape=jax.ShapeDtypeStruct((b, c, hw), jnp.float32),
        compiler_params=pltpu.CompilerParams(dimension_semantics=("parallel",)),
    )(xr, wp, wt, wg, wm)

    return out.reshape(b, c, h, w)


def nonlocal_block_reference(x, w_phi, w_theta, w_g, w_mask):
    """Pure-JAX mirror of the PyTorch forward (including the .view 'bug')."""
    b, c, h, w = x.shape
    ci = c // 2
    hw = h * w
    xf = x.reshape(b, c, hw)
    phi = jnp.einsum("oc,bcs->bos", w_phi, xf).reshape(b, c, hw // 2)          # (b, c, N)
    theta = jnp.einsum("oc,bcs->bos", w_theta, xf).reshape(b, c, hw // 2)
    theta = jnp.transpose(theta, (0, 2, 1))                                     # (b, N, c)
    g = jnp.einsum("oc,bcs->bos", w_g, xf).reshape(b, c, hw // 2)
    g = jnp.transpose(g, (0, 2, 1))                                             # (b, N, c)
    attn = jnp.einsum("bnc,bcm->bnm", theta, phi)                               # (b, N, N)
    attn = jax.nn.softmax(attn, axis=1)                                         # dim=1
    o = jnp.einsum("bnm,bmc->bnc", attn, g)                                     # (b, N, c)
    o = jnp.transpose(o, (0, 2, 1)).reshape(b, ci, h, w)
    mask = jnp.einsum("oc,bchw->bohw", w_mask, o)
    return mask + x


if __name__ == "__main__":
    key = jax.random.PRNGKey(0)
    kx, k1, k2, k3, k4 = jax.random.split(key, 5)

    B, C, H, W = 2, 64, 16, 16          # AHBF uses NonLocalBlockND(64)
    CI = C // 2

    x = jax.random.normal(kx, (B, C, H, W), dtype=jnp.float32)
    w_phi = 0.05 * jax.random.normal(k1, (CI, C), dtype=jnp.float32)
    w_theta = 0.05 * jax.random.normal(k2, (CI, C), dtype=jnp.float32)
    w_g = 0.05 * jax.random.normal(k3, (CI, C), dtype=jnp.float32)
    w_mask = 0.05 * jax.random.normal(k4, (C, CI), dtype=jnp.float32)

    ref = nonlocal_block_reference(x, w_phi, w_theta, w_g, w_mask)

    # f32 operand path (default; recommended on v5e)
    out_f32 = nonlocal_block_forward(x, w_phi, w_theta, w_g, w_mask)
    jax.block_until_ready(out_f32)
    assert out_f32.shape == (B, C, H, W)
    err_f32 = float(jnp.max(jnp.abs(out_f32 - ref)))
    assert err_f32 < 1e-3, f"f32 kernel mismatch vs reference: {err_f32}"

    # bf16 operand path (f32 accumulate; recommended on v6e/v7x), gated by tolerance.
    out_bf16 = nonlocal_block_forward(x, w_phi, w_theta, w_g, w_mask,
                                      compute_dtype=jnp.bfloat16)
    jax.block_until_ready(out_bf16)
    err_bf16 = float(jnp.max(jnp.abs(out_bf16 - ref)))
    assert err_bf16 < 5e-2, f"bf16 kernel mismatch vs reference: {err_bf16}"

    print("KERNEL_OK")
</pallas_src>

<mosaic_0001>
module attributes {stable_mosaic.version = 11 : i64} {
  func.func @kernel(%arg0: i32, %arg1: memref<2x64x256xf32, #tpu.memory_space<vmem>>, %arg2: memref<32x64xf32, #tpu.memory_space<vmem>>, %arg3: memref<32x64xf32, #tpu.memory_space<vmem>>, %arg4: memref<32x64xf32, #tpu.memory_space<vmem>>, %arg5: memref<64x32xf32, #tpu.memory_space<vmem>>, %arg6: memref<2x64x256xf32, #tpu.memory_space<vmem>>) attributes {dimension_semantics = [#tpu.dimension_semantics<parallel>], iteration_bounds = array<i64: 1>, scalar_prefetch = 0 : i64, scratch_operands = 0 : i64, tpu.core_type = #tpu.core_type<tc>, window_params = [{transform_indices = @transform_0, window_bounds = array<i64: 2, 64, 256>}, {pipeline_mode = #tpu.pipeline_mode<synchronous>, transform_indices = @transform_1, window_bounds = array<i64: 32, 64>}, {pipeline_mode = #tpu.pipeline_mode<synchronous>, transform_indices = @transform_2, window_bounds = array<i64: 32, 64>}, {pipeline_mode = #tpu.pipeline_mode<synchronous>, transform_indices = @transform_3, window_bounds = array<i64: 32, 64>}, {pipeline_mode = #tpu.pipeline_mode<synchronous>, transform_indices = @transform_4, window_bounds = array<i64: 64, 32>}, {transform_indices = @transform_5, window_bounds = array<i64: 2, 64, 256>}]} {
    %c0 = arith.constant 0 : index
    %c0_0 = arith.constant 0 : index
    %0 = vector.load %arg2[%c0, %c0_0] : memref<32x64xf32, #tpu.memory_space<vmem>>, vector<32x64xf32>
    %c0_1 = arith.constant 0 : index
    %c0_2 = arith.constant 0 : index
    %1 = vector.load %arg3[%c0_1, %c0_2] : memref<32x64xf32, #tpu.memory_space<vmem>>, vector<32x64xf32>
    %c0_3 = arith.constant 0 : index
    %c0_4 = arith.constant 0 : index
    %2 = vector.load %arg4[%c0_3, %c0_4] : memref<32x64xf32, #tpu.memory_space<vmem>>, vector<32x64xf32>
    %c0_5 = arith.constant 0 : index
    %c0_6 = arith.constant 0 : index
    %3 = vector.load %arg5[%c0_5, %c0_6] : memref<64x32xf32, #tpu.memory_space<vmem>>, vector<64x32xf32>
    %c0_7 = arith.constant 0 : index
    %c0_8 = arith.constant 0 : index
    %c0_9 = arith.constant 0 : index
    %4 = vector.load %arg1[%c0_7, %c0_8, %c0_9] : memref<2x64x256xf32, #tpu.memory_space<vmem>>, vector<1x64x256xf32>
    %5 = vector.shape_cast %4 : vector<1x64x256xf32> to vector<64x256xf32>
    %cst = arith.constant dense<0.000000e+00> : vector<32x256xf32>
    %6 = tpu.matmul %0, %5, %cst {dimension_numbers = #tpu.dot_dimension_numbers<[1], [0], [0], [1], [0, 0, 1, 1], [], []>} : vector<32x64xf32>, vector<64x256xf32>, vector<32x256xf32> -> vector<32x256xf32>
    %cst_10 = arith.constant dense<0.000000e+00> : vector<32x256xf32>
    %7 = tpu.matmul %1, %5, %cst_10 {dimension_numbers = #tpu.dot_dimension_numbers<[1], [0], [0], [1], [0, 0, 1, 1], [], []>} : vector<32x64xf32>, vector<64x256xf32>, vector<32x256xf32> -> vector<32x256xf32>
    %cst_11 = arith.constant dense<0.000000e+00> : vector<32x256xf32>
    %8 = tpu.matmul %2, %5, %cst_11 {dimension_numbers = #tpu.dot_dimension_numbers<[1], [0], [0], [1], [0, 0, 1, 1], [], []>} : vector<32x64xf32>, vector<64x256xf32>, vector<32x256xf32> -> vector<32x256xf32>
    %9 = vector.extract_strided_slice %7 {offsets = [0, 0], sizes = [32, 128], strides = [1, 1]} : vector<32x256xf32> to vector<32x128xf32>
    %10 = vector.extract_strided_slice %7 {offsets = [0, 128], sizes = [32, 128], strides = [1, 1]} : vector<32x256xf32> to vector<32x128xf32>
    %11 = vector.extract_strided_slice %6 {offsets = [0, 0], sizes = [32, 128], strides = [1, 1]} : vector<32x256xf32> to vector<32x128xf32>
    %12 = vector.extract_strided_slice %6 {offsets = [0, 128], sizes = [32, 128], strides = [1, 1]} : vector<32x256xf32> to vector<32x128xf32>
    %cst_12 = arith.constant dense<0.000000e+00> : vector<128x128xf32>
    %13 = tpu.matmul %9, %11, %cst_12 {dimension_numbers = #tpu.dot_dimension_numbers<[0], [0], [1], [1], [0, 1, 1, 1], [], []>} : vector<32x128xf32>, vector<32x128xf32>, vector<128x128xf32> -> vector<128x128xf32>
    %cst_13 = arith.constant dense<0.000000e+00> : vector<128x128xf32>
    %14 = tpu.matmul %10, %12, %cst_13 {dimension_numbers = #tpu.dot_dimension_numbers<[0], [0], [1], [1], [0, 1, 1, 1], [], []>} : vector<32x128xf32>, vector<32x128xf32>, vector<128x128xf32> -> vector<128x128xf32>
    %15 = arith.addf %13, %14 : vector<128x128xf32>
    %cst_14 = arith.constant dense<0xFF800000> : vector<128xf32>
    %16 = vector.multi_reduction <maximumf>, %15, %cst_14 [0] : vector<128x128xf32> to vector<128xf32>
    %17 = vector.shape_cast %16 : vector<128xf32> to vector<1x128xf32>
    %18 = vector.broadcast %17 : vector<1x128xf32> to vector<128x128xf32>
    %19 = arith.subf %15, %18 : vector<128x128xf32>
    %20 = math.exp %19 : vector<128x128xf32>
    %cst_15 = arith.constant dense<0.000000e+00> : vector<128xf32>
    %21 = vector.multi_reduction <add>, %20, %cst_15 [0] : vector<128x128xf32> to vector<128xf32>
    %22 = vector.shape_cast %21 : vector<128xf32> to vector<1x128xf32>
    %23 = tpu.reciprocal %22 {approx = true} : vector<1x128xf32> -> vector<1x128xf32>
    %24 = vector.broadcast %23 : vector<1x128xf32> to vector<128x128xf32>
    %25 = arith.mulf %20, %24 : vector<128x128xf32>
    %26 = vector.extract_strided_slice %8 {offsets = [0, 0], sizes = [32, 128], strides = [1, 1]} : vector<32x256xf32> to vector<32x128xf32>
    %27 = vector.extract_strided_slice %8 {offsets = [0, 128], sizes = [32, 128], strides = [1, 1]} : vector<32x256xf32> to vector<32x128xf32>
    %cst_16 = arith.constant dense<0.000000e+00> : vector<32x128xf32>
    %28 = tpu.matmul %26, %25, %cst_16 {dimension_numbers = #tpu.dot_dimension_numbers<[1], [1], [0], [0], [0, 0, 1, 0], [], []>} : vector<32x128xf32>, vector<128x128xf32>, vector<32x128xf32> -> vector<32x128xf32>
    %cst_17 = arith.constant dense<0.000000e+00> : vector<32x128xf32>
    %29 = tpu.matmul %27, %25, %cst_17 {dimension_numbers = #tpu.dot_dimension_numbers<[1], [1], [0], [0], [0, 0, 1, 0], [], []>} : vector<32x128xf32>, vector<128x128xf32>, vector<32x128xf32> -> vector<32x128xf32>
    %cst_18 = arith.constant dense<0.000000e+00> : vector<64x128xf32>
    %30 = tpu.matmul %3, %28, %cst_18 {dimension_numbers = #tpu.dot_dimension_numbers<[1], [0], [0], [1], [0, 0, 1, 1], [], []>} : vector<64x32xf32>, vector<32x128xf32>, vector<64x128xf32> -> vector<64x128xf32>
    %cst_19 = arith.constant dense<0.000000e+00> : vector<64x128xf32>
    %31 = tpu.matmul %3, %29, %cst_19 {dimension_numbers = #tpu.dot_dimension_numbers<[1], [0], [0], [1], [0, 0, 1, 1], [], []>} : vector<64x32xf32>, vector<32x128xf32>, vector<64x128xf32> -> vector<64x128xf32>
    %32 = vector.extract_strided_slice %5 {offsets = [0, 0], sizes = [64, 128], strides = [1, 1]} : vector<64x256xf32> to vector<64x128xf32>
    %33 = arith.addf %30, %32 : vector<64x128xf32>
    %c0_20 = arith.constant 0 : index
    %c0_21 = arith.constant 0 : index
    %c0_22 = arith.constant 0 : index
    %34 = vector.load %arg6[%c0_20, %c0_21, %c0_22] : memref<2x64x256xf32, #tpu.memory_space<vmem>>, vector<1x64x128xf32>
    %35 = vector.shape_cast %34 : vector<1x64x128xf32> to vector<64x128xf32>
    %36 = vector.shape_cast %33 : vector<64x128xf32> to vector<1x64x128xf32>
    tpu.vector_store %arg6[%c0_20, %c0_21, %c0_22], %36 {strides = array<i32>} : memref<2x64x256xf32, #tpu.memory_space<vmem>>, vector<1x64x128xf32>,
    %37 = vector.extract_strided_slice %5 {offsets = [0, 128], sizes = [64, 128], strides = [1, 1]} : vector<64x256xf32> to vector<64x128xf32>
    %38 = arith.addf %31, %37 : vector<64x128xf32>
    %c0_23 = arith.constant 0 : index
    %c0_24 = arith.constant 0 : index
    %c128 = arith.constant 128 : index
    %39 = vector.load %arg6[%c0_23, %c0_24, %c128] : memref<2x64x256xf32, #tpu.memory_space<vmem>>, vector<1x64x128xf32>
    %40 = vector.shape_cast %39 : vector<1x64x128xf32> to vector<64x128xf32>
    %41 = vector.shape_cast %38 : vector<64x128xf32> to vector<1x64x128xf32>
    tpu.vector_store %arg6[%c0_23, %c0_24, %c128], %41 {strides = array<i32>} : memref<2x64x256xf32, #tpu.memory_space<vmem>>, vector<1x64x128xf32>,
    %c1 = arith.constant 1 : index
    %c0_25 = arith.constant 0 : index
    %c0_26 = arith.constant 0 : index
    %42 = vector.load %arg1[%c1, %c0_25, %c0_26] : memref<2x64x256xf32, #tpu.memory_space<vmem>>, vector<1x64x256xf32>
    %43 = vector.shape_cast %42 : vector<1x64x256xf32> to vector<64x256xf32>
    %cst_27 = arith.constant dense<0.000000e+00> : vector<32x256xf32>
    %44 = tpu.matmul %0, %43, %cst_27 {dimension_numbers = #tpu.dot_dimension_numbers<[1], [0], [0], [1], [0, 0, 1, 1], [], []>} : vector<32x64xf32>, vector<64x256xf32>, vector<32x256xf32> -> vector<32x256xf32>
    %cst_28 = arith.constant dense<0.000000e+00> : vector<32x256xf32>
    %45 = tpu.matmul %1, %43, %cst_28 {dimension_numbers = #tpu.dot_dimension_numbers<[1], [0], [0], [1], [0, 0, 1, 1], [], []>} : vector<32x64xf32>, vector<64x256xf32>, vector<32x256xf32> -> vector<32x256xf32>
    %cst_29 = arith.constant dense<0.000000e+00> : vector<32x256xf32>
    %46 = tpu.matmul %2, %43, %cst_29 {dimension_numbers = #tpu.dot_dimension_numbers<[1], [0], [0], [1], [0, 0, 1, 1], [], []>} : vector<32x64xf32>, vector<64x256xf32>, vector<32x256xf32> -> vector<32x256xf32>
    %47 = vector.extract_strided_slice %45 {offsets = [0, 0], sizes = [32, 128], strides = [1, 1]} : vector<32x256xf32> to vector<32x128xf32>
    %48 = vector.extract_strided_slice %45 {offsets = [0, 128], sizes = [32, 128], strides = [1, 1]} : vector<32x256xf32> to vector<32x128xf32>
    %49 = vector.extract_strided_slice %44 {offsets = [0, 0], sizes = [32, 128], strides = [1, 1]} : vector<32x256xf32> to vector<32x128xf32>
    %50 = vector.extract_strided_slice %44 {offsets = [0, 128], sizes = [32, 128], strides = [1, 1]} : vector<32x256xf32> to vector<32x128xf32>
    %cst_30 = arith.constant dense<0.000000e+00> : vector<128x128xf32>
    %51 = tpu.matmul %47, %49, %cst_30 {dimension_numbers = #tpu.dot_dimension_numbers<[0], [0], [1], [1], [0, 1, 1, 1], [], []>} : vector<32x128xf32>, vector<32x128xf32>, vector<128x128xf32> -> vector<128x128xf32>
    %cst_31 = arith.constant dense<0.000000e+00> : vector<128x128xf32>
    %52 = tpu.matmul %48, %50, %cst_31 {dimension_numbers = #tpu.dot_dimension_numbers<[0], [0], [1], [1], [0, 1, 1, 1], [], []>} : vector<32x128xf32>, vector<32x128xf32>, vector<128x128xf32> -> vector<128x128xf32>
    %53 = arith.addf %51, %52 : vector<128x128xf32>
    %cst_32 = arith.constant dense<0xFF800000> : vector<128xf32>
    %54 = vector.multi_reduction <maximumf>, %53, %cst_32 [0] : vector<128x128xf32> to vector<128xf32>
    %55 = vector.shape_cast %54 : vector<128xf32> to vector<1x128xf32>
    %56 = vector.broadcast %55 : vector<1x128xf32> to vector<128x128xf32>
    %57 = arith.subf %53, %56 : vector<128x128xf32>
    %58 = math.exp %57 : vector<128x128xf32>
    %cst_33 = arith.constant dense<0.000000e+00> : vector<128xf32>
    %59 = vector.multi_reduction <add>, %58, %cst_33 [0] : vector<128x128xf32> to vector<128xf32>
    %60 = vector.shape_cast %59 : vector<128xf32> to vector<1x128xf32>
    %61 = tpu.reciprocal %60 {approx = true} : vector<1x128xf32> -> vector<1x128xf32>
    %62 = vector.broadcast %61 : vector<1x128xf32> to vector<128x128xf32>
    %63 = arith.mulf %58, %62 : vector<128x128xf32>
    %64 = vector.extract_strided_slice %46 {offsets = [0, 0], sizes = [32, 128], strides = [1, 1]} : vector<32x256xf32> to vector<32x128xf32>
    %65 = vector.extract_strided_slice %46 {offsets = [0, 128], sizes = [32, 128], strides = [1, 1]} : vector<32x256xf32> to vector<32x128xf32>
    %cst_34 = arith.constant dense<0.000000e+00> : vector<32x128xf32>
    %66 = tpu.matmul %64, %63, %cst_34 {dimension_numbers = #tpu.dot_dimension_numbers<[1], [1], [0], [0], [0, 0, 1, 0], [], []>} : vector<32x128xf32>, vector<128x128xf32>, vector<32x128xf32> -> vector<32x128xf32>
    %cst_35 = arith.constant dense<0.000000e+00> : vector<32x128xf32>
    %67 = tpu.matmul %65, %63, %cst_35 {dimension_numbers = #tpu.dot_dimension_numbers<[1], [1], [0], [0], [0, 0, 1, 0], [], []>} : vector<32x128xf32>, vector<128x128xf32>, vector<32x128xf32> -> vector<32x128xf32>
    %cst_36 = arith.constant dense<0.000000e+00> : vector<64x128xf32>
    %68 = tpu.matmul %3, %66, %cst_36 {dimension_numbers = #tpu.dot_dimension_numbers<[1], [0], [0], [1], [0, 0, 1, 1], [], []>} : vector<64x32xf32>, vector<32x128xf32>, vector<64x128xf32> -> vector<64x128xf32>
    %cst_37 = arith.constant dense<0.000000e+00> : vector<64x128xf32>
    %69 = tpu.matmul %3, %67, %cst_37 {dimension_numbers = #tpu.dot_dimension_numbers<[1], [0], [0], [1], [0, 0, 1, 1], [], []>} : vector<64x32xf32>, vector<32x128xf32>, vector<64x128xf32> -> vector<64x128xf32>
    %70 = vector.extract_strided_slice %43 {offsets = [0, 0], sizes = [64, 128], strides = [1, 1]} : vector<64x256xf32> to vector<64x128xf32>
    %71 = arith.addf %68, %70 : vector<64x128xf32>
    %c1_38 = arith.constant 1 : index
    %c0_39 = arith.constant 0 : index
    %c0_40 = arith.constant 0 : index
    %72 = vector.load %arg6[%c1_38, %c0_39, %c0_40] : memref<2x64x256xf32, #tpu.memory_space<vmem>>, vector<1x64x128xf32>
    %73 = vector.shape_cast %72 : vector<1x64x128xf32> to vector<64x128xf32>
    %74 = vector.shape_cast %71 : vector<64x128xf32> to vector<1x64x128xf32>
    tpu.vector_store %arg6[%c1_38, %c0_39, %c0_40], %74 {strides = array<i32>} : memref<2x64x256xf32, #tpu.memory_space<vmem>>, vector<1x64x128xf32>,
    %75 = vector.extract_strided_slice %43 {offsets = [0, 128], sizes = [64, 128], strides = [1, 1]} : vector<64x256xf32> to vector<64x128xf32>
    %76 = arith.addf %69, %75 : vector<64x128xf32>
    %c1_41 = arith.constant 1 : index
    %c0_42 = arith.constant 0 : index
    %c128_43 = arith.constant 128 : index
    %77 = vector.load %arg6[%c1_41, %c0_42, %c128_43] : memref<2x64x256xf32, #tpu.memory_space<vmem>>, vector<1x64x128xf32>
    %78 = vector.shape_cast %77 : vector<1x64x128xf32> to vector<64x128xf32>
    %79 = vector.shape_cast %76 : vector<64x128xf32> to vector<1x64x128xf32>
    tpu.vector_store %arg6[%c1_41, %c0_42, %c128_43], %79 {strides = array<i32>} : memref<2x64x256xf32, #tpu.memory_space<vmem>>, vector<1x64x128xf32>,
    return
  }
  func.func @transform_0(%arg0: i32) -> (i32, i32, i32) {
    %c0_i32 = arith.constant 0 : i32
    %c0_i32_0 = arith.constant 0 : i32
    %c0_i32_1 = arith.constant 0 : i32
    return %arg0, %c0_i32, %c0_i32_0 : i32, i32, i32
  }
  func.func @transform_1(%arg0: i32) -> (i32, i32) {
    %c0_i32 = arith.constant 0 : i32
    %c0_i32_0 = arith.constant 0 : i32
    %c0_i32_1 = arith.constant 0 : i32
    return %c0_i32, %c0_i32_0 : i32, i32
  }
  func.func @transform_2(%arg0: i32) -> (i32, i32) {
    %c0_i32 = arith.constant 0 : i32
    %c0_i32_0 = arith.constant 0 : i32
    %c0_i32_1 = arith.constant 0 : i32
    return %c0_i32, %c0_i32_0 : i32, i32
  }
  func.func @transform_3(%arg0: i32) -> (i32, i32) {
    %c0_i32 = arith.constant 0 : i32
    %c0_i32_0 = arith.constant 0 : i32
    %c0_i32_1 = arith.constant 0 : i32
    return %c0_i32, %c0_i32_0 : i32, i32
  }
  func.func @transform_4(%arg0: i32) -> (i32, i32) {
    %c0_i32 = arith.constant 0 : i32
    %c0_i32_0 = arith.constant 0 : i32
    %c0_i32_1 = arith.constant 0 : i32
    return %c0_i32, %c0_i32_0 : i32, i32
  }
  func.func @transform_5(%arg0: i32) -> (i32, i32, i32) {
    %c0_i32 = arith.constant 0 : i32
    %c0_i32_0 = arith.constant 0 : i32
    %c0_i32_1 = arith.constant 0 : i32
    return %arg0, %c0_i32, %c0_i32_0 : i32, i32, i32
  }
}

</mosaic_0001>

<llo_original>
// kernel: tpu_custom_call.1
$region0: #{tpu_custom_call.1}
  #allocation0 [shape = 'u32[]', space=smem, size = 0x4, offset = 0x4, fixed_abs, tag = 'smem constant byte address 0x4 - core index']
  #allocation1 [shape = 'u32[72,128]{1,0:T(1,128)}', space=vmem, size = 0x9000, scoped, tag = 'internal scratch']
  %s0 = inlined_call_operand.hbm [shape: f32[2,64,256], index: 0, kind: input, shape index: {}]
  %s1 = inlined_call_operand.vmem [shape: f32[32,64], index: 1, kind: input, shape index: {}]
  %s2 = inlined_call_operand.vmem [shape: f32[32,64], index: 2, kind: input, shape index: {}]
  %s3 = inlined_call_operand.vmem [shape: f32[32,64], index: 3, kind: input, shape index: {}]
  %s4 = inlined_call_operand.vmem [shape: f32[64,32], index: 4, kind: input, shape index: {}]
  %s5 = inlined_call_operand.hbm [shape: f32[2,64,256], index: 5, kind: output, shape index: {}]
  %s6 = sld [smem:[#allocation0]]
  $region34: #{tpu_custom_call.1} parent=0
    _
  %s8 = ssub.s32 1, %s6
  %s9 = scalar_select 0, %s8, %s6
  $region1: #{tpu_custom_call.1} parent=0
    #allocation2 [shape = 'u8[131072]{0}', space=vmem, size = 0x20000, scoped, tag = 'input window, operand 0, single buffered']
    #allocation3 [shape = 's32[1]{0}', space=sflag, size = 0x4, scoped, tag = 'scoped memory for tpu_custom_call.1']
    #allocation4 [shape = 's32[1]{0}', space=sflag, size = 0x4, scoped, tag = 'scoped memory for tpu_custom_call.1']
    #allocation5 [shape = 'u8[131072]{0}', space=vmem, size = 0x20000, scoped, tag = 'output window, operand 0, single buffered']
    %10 = vsyncpa [#allocation3], 0
    %11 = vsyncpa [#allocation4], 0
    // Predicated region
    $region2: #{tpu_custom_call.1} parent=1 // pred_check
      _
    $region3: #{tpu_custom_call.1} parent=1 // pred_check_branch
      %13 = sbr.rel (0) target = $region5
    $region4: #{tpu_custom_call.1} parent=1 // pred_region
      %15 = vsyncadd [#allocation3], 0
      %s16 = sshll.u32 %s0, 4
      %s17 = int_to_ptr.hbm [resolvable:$true] %s16
      %s18 = sshll.u32 [#allocation2], 4
      %s19 = int_to_ptr.vmem [resolvable:$true] %s18
      %24 = dma.hbm_to_vmem [thread:$0]  %s17, 4096, %s19, [#allocation3], 256, 256, 16
    $region5: #{tpu_custom_call.1} parent=1 // pred_fallthru
      _
    // Predicated region
    $region6: #{tpu_custom_call.1} parent=1 // pred_check
      _
    $region7: #{tpu_custom_call.1} parent=1 // pred_check_branch
      %26 = sbr.rel (0) target = $region9
    $region8: #{tpu_custom_call.1} parent=1 // pred_region
      _
    $region9: #{tpu_custom_call.1} parent=1 // pred_fallthru
      _
    // Predicated region
    $region10: #{tpu_custom_call.1} parent=1 // pred_check
      _
    $region11: #{tpu_custom_call.1} parent=1 // pred_check_branch
      %28 = sbr.rel (0) target = $region13
    $region12: #{tpu_custom_call.1} parent=1 // pred_region
      _
    $region13: #{tpu_custom_call.1} parent=1 // pred_fallthru
      _
    // Predicated region
    $region14: #{tpu_custom_call.1} parent=1 // pred_check
      _
    $region15: #{tpu_custom_call.1} parent=1 // pred_check_branch
      %30 = sbr.rel (0) target = $region17
    $region16: #{tpu_custom_call.1} parent=1 // pred_region
      _
    $region17: #{tpu_custom_call.1} parent=1 // pred_fallthru
      _
    // Predicated region
    $region18: #{tpu_custom_call.1} parent=1 // pred_check
      _
    $region19: #{tpu_custom_call.1} parent=1 // pred_check_branch
      %32 = sbr.rel (0) target = $region21
    $region20: #{tpu_custom_call.1} parent=1 // pred_region
      _
    $region21: #{tpu_custom_call.1} parent=1 // pred_fallthru
      _
    // Predicated region
    $region22: #{tpu_custom_call.1} parent=1 // pred_check
      _
    $region23: #{tpu_custom_call.1} parent=1 // pred_check_branch
      %34 = sbr.rel (0) target = $region25
    $region24: #{tpu_custom_call.1} parent=1 // pred_region
      %36 = dma.done [#allocation3], 4096
    $region25: #{tpu_custom_call.1} parent=1 // pred_fallthru
      _
    %v37 = vld [vmem:[%s1] sm:$0xff]
    %v38 = vld [vmem:[%s1 + $0x8] sm:$0xff]
    %v39 = vld [vmem:[%s1 + $0x10] sm:$0xff]
    %v40 = vld [vmem:[%s1 + $0x18] sm:$0xff]
    %v41 = vld [vmem:[%s2] sm:$0xff]
    %v42 = vld [vmem:[%s2 + $0x8] sm:$0xff]
    %v43 = vld [vmem:[%s2 + $0x10] sm:$0xff]
    %v44 = vld [vmem:[%s2 + $0x18] sm:$0xff]
    %v45 = vld [vmem:[%s3] sm:$0xff]
    %v46 = vld [vmem:[%s3 + $0x8] sm:$0xff]
    %v47 = vld [vmem:[%s3 + $0x10] sm:$0xff]
    %v48 = vld [vmem:[%s3 + $0x18] sm:$0xff]
    %v49 = vld [vmem:[%s4] sm:$0xff]
    %v50 = vld [vmem:[%s4 + $0x8] sm:$0xff]
    %v51 = vld [vmem:[%s4 + $0x10] sm:$0xff]
    %v52 = vld [vmem:[%s4 + $0x18] sm:$0xff]
    %v53 = vld [vmem:[%s4 + $0x20] sm:$0xff]
    %v54 = vld [vmem:[%s4 + $0x28] sm:$0xff]
    %v55 = vld [vmem:[%s4 + $0x30] sm:$0xff]
    %v56 = vld [vmem:[%s4 + $0x38] sm:$0xff]
    %v57 = vld [vmem:[#allocation2] sm:$0xff]
    %v58 = vld [vmem:[#allocation2 + $0x8] sm:$0xff]
    %v59 = vld [vmem:[#allocation2 + $0x10] sm:$0xff]
    %v60 = vld [vmem:[#allocation2 + $0x18] sm:$0xff]
    %v61 = vld [vmem:[#allocation2 + $0x20] sm:$0xff]
    %v62 = vld [vmem:[#allocation2 + $0x28] sm:$0xff]
    %v63 = vld [vmem:[#allocation2 + $0x30] sm:$0xff]
    %v64 = vld [vmem:[#allocation2 + $0x38] sm:$0xff]
    %v65 = vld [vmem:[#allocation2 + $0x40] sm:$0xff]
    %v66 = vld [vmem:[#allocation2 + $0x48] sm:$0xff]
    %v67 = vld [vmem:[#allocation2 + $0x50] sm:$0xff]
    %v68 = vld [vmem:[#allocation2 + $0x58] sm:$0xff]
    %v69 = vld [vmem:[#allocation2 + $0x60] sm:$0xff]
    %v70 = vld [vmem:[#allocation2 + $0x68] sm:$0xff]
    %v71 = vld [vmem:[#allocation2 + $0x70] sm:$0xff]
    %v72 = vld [vmem:[#allocation2 + $0x78] sm:$0xff]
    %vm73 = vcmask 523264
    %v75 = vsel %vm73, %v37, 0
    %v78 = vsel %vm73, %v38, 0
    %v81 = vsel %vm73, %v39, 0
    %v84 = vsel %vm73, %v40, 0
    %86 = vmatpush.msra.mxu0 0.0
    %87 = vmatpush.msra.mxu0 0.0
    %88 = vmatpush.msra.mxu0 0.0
    %89 = vmatpush.msra.mxu0 0.0
    %90 = vmatpush.msra.mxu0 0.0
    %91 = vmatpush.msra.mxu0 0.0
    %92 = vmatpush.msra.mxu0 0.0
    %93 = vmatpush.msra.mxu0 0.0
    %94 = vmatpush.msra.mxu0 %v71
    %95 = vmatpush.msra.mxu0 %v69
    %96 = vmatpush.msra.mxu0 %v67
    %97 = vmatpush.msra.mxu0 %v65
    %98 = vmatpush.msra.mxu0 %v63
    %99 = vmatpush.msra.mxu0 %v61
    %100 = vmatpush.msra.mxu0 %v59
    %101 = vmatpush.msra.mxu0 %v57
    %102 = vmatmul.f32.gmra.mxu0 %v75
    %v103 = vpop.f32.mrf.mxu0
    %v104 = vadd.f32 0.0, %v103
    %105 = vmatmul.f32.gmra.mxu0 %v78
    %v106 = vpop.f32.mrf.mxu0
    %v107 = vadd.f32 0.0, %v106
    %108 = vmatmul.f32.gmra.mxu0 %v81
    %v109 = vpop.f32.mrf.mxu0
    %v110 = vadd.f32 0.0, %v109
    %111 = vmatmul.f32.gmra.mxu0 %v84
    %v112 = vpop.f32.mrf.mxu0
    %v113 = vadd.f32 0.0, %v112
    %114 = vdwg.mxu0
    %115 = vmatpush.msra.mxu0 0.0
    %116 = vmatpush.msra.mxu0 0.0
    %117 = vmatpush.msra.mxu0 0.0
    %118 = vmatpush.msra.mxu0 0.0
    %119 = vmatpush.msra.mxu0 0.0
    %120 = vmatpush.msra.mxu0 0.0
    %121 = vmatpush.msra.mxu0 0.0
    %122 = vmatpush.msra.mxu0 0.0
    %123 = vmatpush.msra.mxu0 %v72
    %124 = vmatpush.msra.mxu0 %v70
    %125 = vmatpush.msra.mxu0 %v68
    %126 = vmatpush.msra.mxu0 %v66
    %127 = vmatpush.msra.mxu0 %v64
    %128 = vmatpush.msra.mxu0 %v62
    %129 = vmatpush.msra.mxu0 %v60
    %130 = vmatpush.msra.mxu0 %v58
    %131 = vmatmul.f32.gmra.mxu0 %v75
    %v132 = vpop.f32.mrf.mxu0
    %v133 = vadd.f32 0.0, %v132
    %134 = vmatmul.f32.gmra.mxu0 %v78
    %v135 = vpop.f32.mrf.mxu0
    %v136 = vadd.f32 0.0, %v135
    %137 = vmatmul.f32.gmra.mxu0 %v81
    %v138 = vpop.f32.mrf.mxu0
    %v139 = vadd.f32 0.0, %v138
    %140 = vmatmul.f32.gmra.mxu0 %v84
    %v141 = vpop.f32.mrf.mxu0
    %v142 = vadd.f32 0.0, %v141
    %143 = vdwg.mxu0
    %v145 = vsel %vm73, %v41, 0
    %v148 = vsel %vm73, %v42, 0
    %v151 = vsel %vm73, %v43, 0
    %v154 = vsel %vm73, %v44, 0
    %156 = vmatpush.msra.mxu0 0.0
    %157 = vmatpush.msra.mxu0 0.0
    %158 = vmatpush.msra.mxu0 0.0
    %159 = vmatpush.msra.mxu0 0.0
    %160 = vmatpush.msra.mxu0 0.0
    %161 = vmatpush.msra.mxu0 0.0
    %162 = vmatpush.msra.mxu0 0.0
    %163 = vmatpush.msra.mxu0 0.0
    %164 = vmatpush.msra.mxu0 %v71
    %165 = vmatpush.msra.mxu0 %v69
    %166 = vmatpush.msra.mxu0 %v67
    %167 = vmatpush.msra.mxu0 %v65
    %168 = vmatpush.msra.mxu0 %v63
    %169 = vmatpush.msra.mxu0 %v61
    %170 = vmatpush.msra.mxu0 %v59
    %171 = vmatpush.msra.mxu0 %v57
    %172 = vmatmul.f32.gmra.mxu0 %v145
    %v173 = vpop.f32.mrf.mxu0
    %v174 = vadd.f32 0.0, %v173
    %175 = vmatmul.f32.gmra.mxu0 %v148
    %v176 = vpop.f32.mrf.mxu0
    %v177 = vadd.f32 0.0, %v176
    %178 = vmatmul.f32.gmra.mxu0 %v151
    %v179 = vpop.f32.mrf.mxu0
    %v180 = vadd.f32 0.0, %v179
    %181 = vmatmul.f32.gmra.mxu0 %v154
    %v182 = vpop.f32.mrf.mxu0
    %v183 = vadd.f32 0.0, %v182
    %184 = vdwg.mxu0
    %185 = vmatpush.msra.mxu0 0.0
    %186 = vmatpush.msra.mxu0 0.0
    %187 = vmatpush.msra.mxu0 0.0
    %188 = vmatpush.msra.mxu0 0.0
    %189 = vmatpush.msra.mxu0 0.0
    %190 = vmatpush.msra.mxu0 0.0
    %191 = vmatpush.msra.mxu0 0.0
    %192 = vmatpush.msra.mxu0 0.0
    %193 = vmatpush.msra.mxu0 %v72
    %194 = vmatpush.msra.mxu0 %v70
    %195 = vmatpush.msra.mxu0 %v68
    %196 = vmatpush.msra.mxu0 %v66
    %197 = vmatpush.msra.mxu0 %v64
    %198 = vmatpush.msra.mxu0 %v62
    %199 = vmatpush.msra.mxu0 %v60
    %200 = vmatpush.msra.mxu0 %v58
    %201 = vmatmul.f32.gmra.mxu0 %v145
    %v202 = vpop.f32.mrf.mxu0
    %v203 = vadd.f32 0.0, %v202
    %204 = vmatmul.f32.gmra.mxu0 %v148
    %v205 = vpop.f32.mrf.mxu0
    %v206 = vadd.f32 0.0, %v205
    %207 = vmatmul.f32.gmra.mxu0 %v151
    %v208 = vpop.f32.mrf.mxu0
    %v209 = vadd.f32 0.0, %v208
    %210 = vmatmul.f32.gmra.mxu0 %v154
    %v211 = vpop.f32.mrf.mxu0
    %v212 = vadd.f32 0.0, %v211
    %213 = vdwg.mxu0
    %v215 = vsel %vm73, %v45, 0
    %v218 = vsel %vm73, %v46, 0
    %v221 = vsel %vm73, %v47, 0
    %v224 = vsel %vm73, %v48, 0
    %226 = vmatpush.msra.mxu0 0.0
    %227 = vmatpush.msra.mxu0 0.0
    %228 = vmatpush.msra.mxu0 0.0
    %229 = vmatpush.msra.mxu0 0.0
    %230 = vmatpush.msra.mxu0 0.0
    %231 = vmatpush.msra.mxu0 0.0
    %232 = vmatpush.msra.mxu0 0.0
    %233 = vmatpush.msra.mxu0 0.0
    %234 = vmatpush.msra.mxu0 %v71
    %235 = vmatpush.msra.mxu0 %v69
    %236 = vmatpush.msra.mxu0 %v67
    %237 = vmatpush.msra.mxu0 %v65
    %238 = vmatpush.msra.mxu0 %v63
    %239 = vmatpush.msra.mxu0 %v61
    %240 = vmatpush.msra.mxu0 %v59
    %241 = vmatpush.msra.mxu0 %v57
    %242 = vmatmul.f32.gmra.mxu0 %v215
    %v243 = vpop.f32.mrf.mxu0
    %v244 = vadd.f32 0.0, %v243
    %245 = vmatmul.f32.gmra.mxu0 %v218
    %v246 = vpop.f32.mrf.mxu0
    %v247 = vadd.f32 0.0, %v246
    %248 = vmatmul.f32.gmra.mxu0 %v221
    %v249 = vpop.f32.mrf.mxu0
    %v250 = vadd.f32 0.0, %v249
    %251 = vmatmul.f32.gmra.mxu0 %v224
    %v252 = vpop.f32.mrf.mxu0
    %v253 = vadd.f32 0.0, %v252
    %254 = vdwg.mxu0
    %255 = vmatpush.msra.mxu0 0.0
    %256 = vmatpush.msra.mxu0 0.0
    %257 = vmatpush.msra.mxu0 0.0
    %258 = vmatpush.msra.mxu0 0.0
    %259 = vmatpush.msra.mxu0 0.0
    %260 = vmatpush.msra.mxu0 0.0
    %261 = vmatpush.msra.mxu0 0.0
    %262 = vmatpush.msra.mxu0 0.0
    %263 = vmatpush.msra.mxu0 %v72
    %264 = vmatpush.msra.mxu0 %v70
    %265 = vmatpush.msra.mxu0 %v68
    %266 = vmatpush.msra.mxu0 %v66
    %267 = vmatpush.msra.mxu0 %v64
    %268 = vmatpush.msra.mxu0 %v62
    %269 = vmatpush.msra.mxu0 %v60
    %270 = vmatpush.msra.mxu0 %v58
    %271 = vmatmul.f32.gmra.mxu0 %v215
    %v272 = vpop.f32.mrf.mxu0
    %v273 = vadd.f32 0.0, %v272
    %274 = vmatmul.f32.gmra.mxu0 %v218
    %v275 = vpop.f32.mrf.mxu0
    %v276 = vadd.f32 0.0, %v275
    %277 = vmatmul.f32.gmra.mxu0 %v221
    %v278 = vpop.f32.mrf.mxu0
    %v279 = vadd.f32 0.0, %v278
    %280 = vmatmul.f32.gmra.mxu0 %v224
    %v281 = vpop.f32.mrf.mxu0
    %v282 = vadd.f32 0.0, %v281
    %283 = vdwg.mxu0
    %284 = vxpose.xlu0.b32.start [1/16] %v203, 128
    %285 = vxpose.xlu0.b32.cont [2/16] %v206, 128
    %286 = vxpose.xlu0.b32.cont [3/16] %v209, 128
    %287 = vxpose.xlu0.b32.cont [4/16] %v212, 128
    %288 = vxpose.xlu0.b32.cont [5/16] 0.0, 128
    %289 = vxpose.xlu0.b32.cont [6/16] 0.0, 128
    %290 = vxpose.xlu0.b32.cont [7/16] 0.0, 128
    %291 = vxpose.xlu0.b32.cont [8/16] 0.0, 128
    %292 = vxpose.xlu0.b32.cont [9/16] 0.0, 128
    %293 = vxpose.xlu0.b32.cont [10/16] 0.0, 128
    %294 = vxpose.xlu0.b32.cont [11/16] 0.0, 128
    %295 = vxpose.xlu0.b32.cont [12/16] 0.0, 128
    %296 = vxpose.xlu0.b32.cont [13/16] 0.0, 128
    %297 = vxpose.xlu0.b32.cont [14/16] 0.0, 128
    %298 = vxpose.xlu0.b32.cont [15/16] 0.0, 128
    %299 = vxpose.xlu0.b32.end [16/16] 0.0, 128
    %v300 = vpop.trf.xlu0
    %v301 = vpop.trf.xlu0
    %v302 = vpop.trf.xlu0
    %v303 = vpop.trf.xlu0
    %v304 = vpop.trf.xlu0
    %v305 = vpop.trf.xlu0
    %v306 = vpop.trf.xlu0
    %v307 = vpop.trf.xlu0
    %v308 = vpop.trf.xlu0
    %v309 = vpop.trf.xlu0
    %v310 = vpop.trf.xlu0
    %v311 = vpop.trf.xlu0
    %v312 = vpop.trf.xlu0
    %v313 = vpop.trf.xlu0
    %v314 = vpop.trf.xlu0
    %v315 = vpop.trf.xlu0
    %vm316 = vcmask 261120
    %v318 = vsel %vm316, %v300, 0
    %v321 = vsel %vm316, %v301, 0
    %v324 = vsel %vm316, %v302, 0
    %v327 = vsel %vm316, %v303, 0
    %v330 = vsel %vm316, %v304, 0
    %v333 = vsel %vm316, %v305, 0
    %v336 = vsel %vm316, %v306, 0
    %v339 = vsel %vm316, %v307, 0
    %v342 = vsel %vm316, %v308, 0
    %v345 = vsel %vm316, %v309, 0
    %v348 = vsel %vm316, %v310, 0
    %v351 = vsel %vm316, %v311, 0
    %v354 = vsel %vm316, %v312, 0
    %v357 = vsel %vm316, %v313, 0
    %v360 = vsel %vm316, %v314, 0
    %v363 = vsel %vm316, %v315, 0
    %365 = vmatpush.msra.mxu0 0.0
    %366 = vmatpush.msra.mxu0 0.0
    %367 = vmatpush.msra.mxu0 0.0
    %368 = vmatpush.msra.mxu0 0.0
    %369 = vmatpush.msra.mxu0 0.0
    %370 = vmatpush.msra.mxu0 0.0
    %371 = vmatpush.msra.mxu0 0.0
    %372 = vmatpush.msra.mxu0 0.0
    %373 = vmatpush.msra.mxu0 0.0
    %374 = vmatpush.msra.mxu0 0.0
    %375 = vmatpush.msra.mxu0 0.0
    %376 = vmatpush.msra.mxu0 0.0
    %377 = vmatpush.msra.mxu0 %v142
    %378 = vmatpush.msra.mxu0 %v139
    %379 = vmatpush.msra.mxu0 %v136
    %380 = vmatpush.msra.mxu0 %v133
    %381 = vmatmul.f32.gmra.mxu0 %v318
    %v382 = vpop.f32.mrf.mxu0
    %v383 = vadd.f32 0.0, %v382
    %384 = vmatmul.f32.gmra.mxu0 %v321
    %v385 = vpop.f32.mrf.mxu0
    %v386 = vadd.f32 0.0, %v385
    %387 = vmatmul.f32.gmra.mxu0 %v324
    %v388 = vpop.f32.mrf.mxu0
    %v389 = vadd.f32 0.0, %v388
    %390 = vmatmul.f32.gmra.mxu0 %v327
    %v391 = vpop.f32.mrf.mxu0
    %v392 = vadd.f32 0.0, %v391
    %393 = vmatmul.f32.gmra.mxu0 %v330
    %v394 = vpop.f32.mrf.mxu0
    %v395 = vadd.f32 0.0, %v394
    %396 = vmatmul.f32.gmra.mxu0 %v333
    %v397 = vpop.f32.mrf.mxu0
    %v398 = vadd.f32 0.0, %v397
    %399 = vmatmul.f32.gmra.mxu0 %v336
    %v400 = vpop.f32.mrf.mxu0
    %v401 = vadd.f32 0.0, %v400
    %402 = vmatmul.f32.gmra.mxu0 %v339
    %v403 = vpop.f32.mrf.mxu0
    %v404 = vadd.f32 0.0, %v403
    %405 = vmatmul.f32.gmra.mxu0 %v342
    %v406 = vpop.f32.mrf.mxu0
    %v407 = vadd.f32 0.0, %v406
    %408 = vmatmul.f32.gmra.mxu0 %v345
    %v409 = vpop.f32.mrf.mxu0
    %v410 = vadd.f32 0.0, %v409
    %411 = vmatmul.f32.gmra.mxu0 %v348
    %v412 = vpop.f32.mrf.mxu0
    %v413 = vadd.f32 0.0, %v412
    %414 = vmatmul.f32.gmra.mxu0 %v351
    %v415 = vpop.f32.mrf.mxu0
    %v416 = vadd.f32 0.0, %v415
    %417 = vmatmul.f32.gmra.mxu0 %v354
    %v418 = vpop.f32.mrf.mxu0
    %v419 = vadd.f32 0.0, %v418
    %420 = vmatmul.f32.gmra.mxu0 %v357
    %v421 = vpop.f32.mrf.mxu0
    %v422 = vadd.f32 0.0, %v421
    %423 = vmatmul.f32.gmra.mxu0 %v360
    %v424 = vpop.f32.mrf.mxu0
    %v425 = vadd.f32 0.0, %v424
    %426 = vmatmul.f32.gmra.mxu0 %v363
    %v427 = vpop.f32.mrf.mxu0
    %v428 = vadd.f32 0.0, %v427
    %429 = vdwg.mxu0
    %430 = vxpose.xlu0.b32.start [1/16] %v174, 128
    %431 = vxpose.xlu0.b32.cont [2/16] %v177, 128
    %432 = vxpose.xlu0.b32.cont [3/16] %v180, 128
    %433 = vxpose.xlu0.b32.cont [4/16] %v183, 128
    %434 = vxpose.xlu0.b32.cont [5/16] 0.0, 128
    %435 = vxpose.xlu0.b32.cont [6/16] 0.0, 128
    %436 = vxpose.xlu0.b32.cont [7/16] 0.0, 128
    %437 = vxpose.xlu0.b32.cont [8/16] 0.0, 128
    %438 = vxpose.xlu0.b32.cont [9/16] 0.0, 128
    %439 = vxpose.xlu0.b32.cont [10/16] 0.0, 128
    %440 = vxpose.xlu0.b32.cont [11/16] 0.0, 128
    %441 = vxpose.xlu0.b32.cont [12/16] 0.0, 128
    %442 = vxpose.xlu0.b32.cont [13/16] 0.0, 128
    %443 = vxpose.xlu0.b32.cont [14/16] 0.0, 128
    %444 = vxpose.xlu0.b32.cont [15/16] 0.0, 128
    %445 = vxpose.xlu0.b32.end [16/16] 0.0, 128
    %v446 = vpop.trf.xlu0
    %v447 = vpop.trf.xlu0
    %v448 = vpop.trf.xlu0
    %v449 = vpop.trf.xlu0
    %v450 = vpop.trf.xlu0
    %v451 = vpop.trf.xlu0
    %v452 = vpop.trf.xlu0
    %v453 = vpop.trf.xlu0
    %v454 = vpop.trf.xlu0
    %v455 = vpop.trf.xlu0
    %v456 = vpop.trf.xlu0
    %v457 = vpop.trf.xlu0
    %v458 = vpop.trf.xlu0
    %v459 = vpop.trf.xlu0
    %v460 = vpop.trf.xlu0
    %v461 = vpop.trf.xlu0
    %v463 = vsel %vm316, %v446, 0
    %v466 = vsel %vm316, %v447, 0
    %v469 = vsel %vm316, %v448, 0
    %v472 = vsel %vm316, %v449, 0
    %v475 = vsel %vm316, %v450, 0
    %v478 = vsel %vm316, %v451, 0
    %v481 = vsel %vm316, %v452, 0
    %v484 = vsel %vm316, %v453, 0
    %v487 = vsel %vm316, %v454, 0
    %v490 = vsel %vm316, %v455, 0
    %v493 = vsel %vm316, %v456, 0
    %v496 = vsel %vm316, %v457, 0
    %v499 = vsel %vm316, %v458, 0
    %v502 = vsel %vm316, %v459, 0
    %v505 = vsel %vm316, %v460, 0
    %v508 = vsel %vm316, %v461, 0
    %510 = vmatpush.msra.mxu0 0.0
    %511 = vmatpush.msra.mxu0 0.0
    %512 = vmatpush.msra.mxu0 0.0
    %513 = vmatpush.msra.mxu0 0.0
    %514 = vmatpush.msra.mxu0 0.0
    %515 = vmatpush.msra.mxu0 0.0
    %516 = vmatpush.msra.mxu0 0.0
    %517 = vmatpush.msra.mxu0 0.0
    %518 = vmatpush.msra.mxu0 0.0
    %519 = vmatpush.msra.mxu0 0.0
    %520 = vmatpush.msra.mxu0 0.0
    %521 = vmatpush.msra.mxu0 0.0
    %522 = vmatpush.msra.mxu0 %v113
    %523 = vmatpush.msra.mxu0 %v110
    %524 = vmatpush.msra.mxu0 %v107
    %525 = vmatpush.msra.mxu0 %v104
    %526 = vmatmul.f32.gmra.mxu0 %v463
    %v527 = vpop.f32.mrf.mxu0
    %v528 = vadd.f32 %v383, %v527
    %529 = vmatmul.f32.gmra.mxu0 %v466
    %v530 = vpop.f32.mrf.mxu0
    %v531 = vadd.f32 %v386, %v530
    %532 = vmatmul.f32.gmra.mxu0 %v469
    %v533 = vpop.f32.mrf.mxu0
    %v534 = vadd.f32 %v389, %v533
    %535 = vmatmul.f32.gmra.mxu0 %v472
    %v536 = vpop.f32.mrf.mxu0
    %v537 = vadd.f32 %v392, %v536
    %538 = vmatmul.f32.gmra.mxu0 %v475
    %v539 = vpop.f32.mrf.mxu0
    %v540 = vadd.f32 %v395, %v539
    %541 = vmatmul.f32.gmra.mxu0 %v478
    %v542 = vpop.f32.mrf.mxu0
    %v543 = vadd.f32 %v398, %v542
    %544 = vmatmul.f32.gmra.mxu0 %v481
    %v545 = vpop.f32.mrf.mxu0
    %v546 = vadd.f32 %v401, %v545
    %547 = vmatmul.f32.gmra.mxu0 %v484
    %v548 = vpop.f32.mrf.mxu0
    %v549 = vadd.f32 %v404, %v548
    %550 = vmatmul.f32.gmra.mxu0 %v487
    %v551 = vpop.f32.mrf.mxu0
    %v552 = vadd.f32 %v407, %v551
    %553 = vmatmul.f32.gmra.mxu0 %v490
    %v554 = vpop.f32.mrf.mxu0
    %v555 = vadd.f32 %v410, %v554
    %556 = vmatmul.f32.gmra.mxu0 %v493
    %v557 = vpop.f32.mrf.mxu0
    %v558 = vadd.f32 %v413, %v557
    %559 = vmatmul.f32.gmra.mxu0 %v496
    %v560 = vpop.f32.mrf.mxu0
    %v561 = vadd.f32 %v416, %v560
    %562 = vmatmul.f32.gmra.mxu0 %v499
    %v563 = vpop.f32.mrf.mxu0
    %v564 = vadd.f32 %v419, %v563
    %565 = vmatmul.f32.gmra.mxu0 %v502
    %v566 = vpop.f32.mrf.mxu0
    %v567 = vadd.f32 %v422, %v566
    %568 = vmatmul.f32.gmra.mxu0 %v505
    %v569 = vpop.f32.mrf.mxu0
    %v570 = vadd.f32 %v425, %v569
    %571 = vmatmul.f32.gmra.mxu0 %v508
    %v572 = vpop.f32.mrf.mxu0
    %v573 = vadd.f32 %v428, %v572
    %574 = vdwg.mxu0
    %v575 = vmax.f32 %v528, %v540
    %v576 = vmax.f32 %v531, %v543
    %v577 = vmax.f32 %v534, %v546
    %v578 = vmax.f32 %v537, %v549
    %v579 = vmax.f32 %v575, %v552
    %v580 = vmax.f32 %v576, %v555
    %v581 = vmax.f32 %v577, %v558
    %v582 = vmax.f32 %v578, %v561
    %v583 = vmax.f32 %v579, %v564
    %v584 = vmax.f32 %v580, %v567
    %v585 = vmax.f32 %v581, %v570
    %v586 = vmax.f32 %v582, %v573
    %v587 = vmax.f32 %v583, %v584
    %v588 = vmax.f32 %v585, %v586
    %v589 = vmax.f32 %v587, %v588
    %v590 = vrot.slane %v589, 4
    %v591 = vmax.f32 %v589, %v590
    %v592 = vrot.slane %v591, 2
    %v593 = vmax.f32 %v591, %v592
    %v594 = vrot.slane %v593, 1
    %v595 = vmax.f32 %v593, %v594
    %v596 = vsub.f32 %v528, %v595
    %v597 = vsub.f32 %v531, %v595
    %v598 = vsub.f32 %v534, %v595
    %v599 = vsub.f32 %v537, %v595
    %v600 = vsub.f32 %v540, %v595
    %v601 = vsub.f32 %v543, %v595
    %v602 = vsub.f32 %v546, %v595
    %v603 = vsub.f32 %v549, %v595
    %v604 = vsub.f32 %v552, %v595
    %v605 = vsub.f32 %v555, %v595
    %v606 = vsub.f32 %v558, %v595
    %v607 = vsub.f32 %v561, %v595
    %v608 = vsub.f32 %v564, %v595
    %v609 = vsub.f32 %v567, %v595
    %v610 = vsub.f32 %v570, %v595
    %v611 = vsub.f32 %v573, %v595
    %v612 = vmul.f32 %v596, 1.442695
    %v613 = vpow.pop %v612
    %v614 = vmul.f32 %v597, 1.442695
    %v615 = vpow.pop %v614
    %v616 = vmul.f32 %v598, 1.442695
    %v617 = vpow.pop %v616
    %v618 = vmul.f32 %v599, 1.442695
    %v619 = vpow.pop %v618
    %v620 = vmul.f32 %v600, 1.442695
    %v621 = vpow.pop %v620
    %v622 = vmul.f32 %v601, 1.442695
    %v623 = vpow.pop %v622
    %v624 = vmul.f32 %v602, 1.442695
    %v625 = vpow.pop %v624
    %v626 = vmul.f32 %v603, 1.442695
    %v627 = vpow.pop %v626
    %v628 = vmul.f32 %v604, 1.442695
    %v629 = vpow.pop %v628
    %v630 = vmul.f32 %v605, 1.442695
    %v631 = vpow.pop %v630
    %v632 = vmul.f32 %v606, 1.442695
    %v633 = vpow.pop %v632
    %v634 = vmul.f32 %v607, 1.442695
    %v635 = vpow.pop %v634
    %v636 = vmul.f32 %v608, 1.442695
    %v637 = vpow.pop %v636
    %v638 = vmul.f32 %v609, 1.442695
    %v639 = vpow.pop %v638
    %v640 = vmul.f32 %v610, 1.442695
    %v641 = vpow.pop %v640
    %v642 = vmul.f32 %v611, 1.442695
    %v643 = vpow.pop %v642
    %v644 = vadd.f32 %v613, %v615
    %v645 = vadd.f32 %v644, %v617
    %v646 = vadd.f32 %v645, %v619
    %v647 = vadd.f32 %v646, %v621
    %v648 = vadd.f32 %v647, %v623
    %v649 = vadd.f32 %v648, %v625
    %v650 = vadd.f32 %v649, %v627
    %v651 = vadd.f32 %v650, %v629
    %v652 = vadd.f32 %v651, %v631
    %v653 = vadd.f32 %v652, %v633
    %v654 = vadd.f32 %v653, %v635
    %v655 = vadd.f32 %v654, %v637
    %v656 = vadd.f32 %v655, %v639
    %v657 = vadd.f32 %v656, %v641
    %v658 = vadd.f32 %v657, %v643
    %v659 = vrot.slane %v658, 4
    %v660 = vadd.f32 %v658, %v659
    %v661 = vrot.slane %v660, 2
    %v662 = vadd.f32 %v660, %v661
    %v663 = vrot.slane %v662, 1
    %v664 = vadd.f32 %v662, %v663
    %v665 = vrcp.pop %v664
    %v666 = vmul.f32 %v613, %v665
    %v667 = vmul.f32 %v615, %v665
    %v668 = vmul.f32 %v617, %v665
    %v669 = vmul.f32 %v619, %v665
    %v670 = vmul.f32 %v621, %v665
    %v671 = vmul.f32 %v623, %v665
    %v672 = vmul.f32 %v625, %v665
    %v673 = vmul.f32 %v627, %v665
    %v674 = vmul.f32 %v629, %v665
    %v675 = vmul.f32 %v631, %v665
    %v676 = vmul.f32 %v633, %v665
    %v677 = vmul.f32 %v635, %v665
    %v678 = vmul.f32 %v637, %v665
    %v679 = vmul.f32 %v639, %v665
    %v680 = vmul.f32 %v641, %v665
    %v681 = vmul.f32 %v643, %v665
    %682 = vmatpush.xpose.msra.mxu0 %v681
    %683 = vmatpush.xpose.msra.mxu0 %v680
    %684 = vmatpush.xpose.msra.mxu0 %v679
    %685 = vmatpush.xpose.msra.mxu0 %v678
    %686 = vmatpush.xpose.msra.mxu0 %v677
    %687 = vmatpush.xpose.msra.mxu0 %v676
    %688 = vmatpush.xpose.msra.mxu0 %v675
    %689 = vmatpush.xpose.msra.mxu0 %v674
    %690 = vmatpush.xpose.msra.mxu0 %v673
    %691 = vmatpush.xpose.msra.mxu0 %v672
    %692 = vmatpush.xpose.msra.mxu0 %v671
    %693 = vmatpush.xpose.msra.mxu0 %v670
    %694 = vmatpush.xpose.msra.mxu0 %v669
    %695 = vmatpush.xpose.msra.mxu0 %v668
    %696 = vmatpush.xpose.msra.mxu0 %v667
    %697 = vmatpush.xpose.msra.mxu0 %v666
    %698 = vmatmul.f32.gmra.mxu0 %v244
    %v699 = vpop.f32.mrf.mxu0
    %v700 = vadd.f32 0.0, %v699
    %701 = vmatmul.f32.gmra.mxu0 %v247
    %v702 = vpop.f32.mrf.mxu0
    %v703 = vadd.f32 0.0, %v702
    %704 = vmatmul.f32.gmra.mxu0 %v250
    %v705 = vpop.f32.mrf.mxu0
    %v706 = vadd.f32 0.0, %v705
    %707 = vmatmul.f32.gmra.mxu0 %v253
    %v708 = vpop.f32.mrf.mxu0
    %v709 = vadd.f32 0.0, %v708
    %710 = vdwg.mxu0
    %711 = vmatpush.xpose.msra.mxu0 %v681
    %712 = vmatpush.xpose.msra.mxu0 %v680
    %713 = vmatpush.xpose.msra.mxu0 %v679
    %714 = vmatpush.xpose.msra.mxu0 %v678
    %715 = vmatpush.xpose.msra.mxu0 %v677
    %716 = vmatpush.xpose.msra.mxu0 %v676
    %717 = vmatpush.xpose.msra.mxu0 %v675
    %718 = vmatpush.xpose.msra.mxu0 %v674
    %719 = vmatpush.xpose.msra.mxu0 %v673
    %720 = vmatpush.xpose.msra.mxu0 %v672
    %721 = vmatpush.xpose.msra.mxu0 %v671
    %722 = vmatpush.xpose.msra.mxu0 %v670
    %723 = vmatpush.xpose.msra.mxu0 %v669
    %724 = vmatpush.xpose.msra.mxu0 %v668
    %725 = vmatpush.xpose.msra.mxu0 %v667
    %726 = vmatpush.xpose.msra.mxu0 %v666
    %727 = vmatmul.f32.gmra.mxu0 %v273
    %v728 = vpop.f32.mrf.mxu0
    %v729 = vadd.f32 0.0, %v728
    %730 = vmatmul.f32.gmra.mxu0 %v276
    %v731 = vpop.f32.mrf.mxu0
    %v732 = vadd.f32 0.0, %v731
    %733 = vmatmul.f32.gmra.mxu0 %v279
    %v734 = vpop.f32.mrf.mxu0
    %v735 = vadd.f32 0.0, %v734
    %736 = vmatmul.f32.gmra.mxu0 %v282
    %v737 = vpop.f32.mrf.mxu0
    %v738 = vadd.f32 0.0, %v737
    %739 = vdwg.mxu0
    %v741 = vsel %vm316, %v49, 0
    %v744 = vsel %vm316, %v50, 0
    %v747 = vsel %vm316, %v51, 0
    %v750 = vsel %vm316, %v52, 0
    %v753 = vsel %vm316, %v53, 0
    %v756 = vsel %vm316, %v54, 0
    %v759 = vsel %vm316, %v55, 0
    %v762 = vsel %vm316, %v56, 0
    %764 = vmatpush.msra.mxu0 0.0
    %765 = vmatpush.msra.mxu0 0.0
    %766 = vmatpush.msra.mxu0 0.0
    %767 = vmatpush.msra.mxu0 0.0
    %768 = vmatpush.msra.mxu0 0.0
    %769 = vmatpush.msra.mxu0 0.0
    %770 = vmatpush.msra.mxu0 0.0
    %771 = vmatpush.msra.mxu0 0.0
    %772 = vmatpush.msra.mxu0 0.0
    %773 = vmatpush.msra.mxu0 0.0
    %774 = vmatpush.msra.mxu0 0.0
    %775 = vmatpush.msra.mxu0 0.0
    %776 = vmatpush.msra.mxu0 %v709
    %777 = vmatpush.msra.mxu0 %v706
    %778 = vmatpush.msra.mxu0 %v703
    %779 = vmatpush.msra.mxu0 %v700
    %780 = vmatmul.f32.gmra.mxu0 %v741
    %v781 = vpop.f32.mrf.mxu0
    %v782 = vadd.f32 %v57, %v781
    %783 = vmatmul.f32.gmra.mxu0 %v744
    %v784 = vpop.f32.mrf.mxu0
    %v785 = vadd.f32 %v59, %v784
    %786 = vmatmul.f32.gmra.mxu0 %v747
    %v787 = vpop.f32.mrf.mxu0
    %v788 = vadd.f32 %v61, %v787
    %789 = vmatmul.f32.gmra.mxu0 %v750
    %v790 = vpop.f32.mrf.mxu0
    %v791 = vadd.f32 %v63, %v790
    %792 = vmatmul.f32.gmra.mxu0 %v753
    %v793 = vpop.f32.mrf.mxu0
    %v794 = vadd.f32 %v65, %v793
    %795 = vmatmul.f32.gmra.mxu0 %v756
    %v796 = vpop.f32.mrf.mxu0
    %v797 = vadd.f32 %v67, %v796
    %798 = vmatmul.f32.gmra.mxu0 %v759
    %v799 = vpop.f32.mrf.mxu0
    %v800 = vadd.f32 %v69, %v799
    %801 = vmatmul.f32.gmra.mxu0 %v762
    %v802 = vpop.f32.mrf.mxu0
    %v803 = vadd.f32 %v71, %v802
    %804 = vdwg.mxu0
    %805 = vst [vmem:[#allocation5] sm:$0xff] %v782
    %806 = vst [vmem:[#allocation5 + $0x10] sm:$0xff] %v785
    %807 = vst [vmem:[#allocation5 + $0x20] sm:$0xff] %v788
    %808 = vst [vmem:[#allocation5 + $0x30] sm:$0xff] %v791
    %809 = vst [vmem:[#allocation5 + $0x40] sm:$0xff] %v794
    %810 = vst [vmem:[#allocation5 + $0x50] sm:$0xff] %v797
    %811 = vst [vmem:[#allocation5 + $0x60] sm:$0xff] %v800
    %812 = vst [vmem:[#allocation5 + $0x70] sm:$0xff] %v803
    %813 = vmatpush.msra.mxu0 0.0
    %814 = vmatpush.msra.mxu0 0.0
    %815 = vmatpush.msra.mxu0 0.0
    %816 = vmatpush.msra.mxu0 0.0
    %817 = vmatpush.msra.mxu0 0.0
    %818 = vmatpush.msra.mxu0 0.0
    %819 = vmatpush.msra.mxu0 0.0
    %820 = vmatpush.msra.mxu0 0.0
    %821 = vmatpush.msra.mxu0 0.0
    %822 = vmatpush.msra.mxu0 0.0
    %823 = vmatpush.msra.mxu0 0.0
    %824 = vmatpush.msra.mxu0 0.0
    %825 = vmatpush.msra.mxu0 %v738
    %826 = vmatpush.msra.mxu0 %v735
    %827 = vmatpush.msra.mxu0 %v732
    %828 = vmatpush.msra.mxu0 %v729
    %829 = vmatmul.f32.gmra.mxu0 %v741
    %v830 = vpop.f32.mrf.mxu0
    %v831 = vadd.f32 %v58, %v830
    %832 = vmatmul.f32.gmra.mxu0 %v744
    %v833 = vpop.f32.mrf.mxu0
    %v834 = vadd.f32 %v60, %v833
    %835 = vmatmul.f32.gmra.mxu0 %v747
    %v836 = vpop.f32.mrf.mxu0
    %v837 = vadd.f32 %v62, %v836
    %838 = vmatmul.f32.gmra.mxu0 %v750
    %v839 = vpop.f32.mrf.mxu0
    %v840 = vadd.f32 %v64, %v839
    %841 = vmatmul.f32.gmra.mxu0 %v753
    %v842 = vpop.f32.mrf.mxu0
    %v843 = vadd.f32 %v66, %v842
    %844 = vmatmul.f32.gmra.mxu0 %v756
    %v845 = vpop.f32.mrf.mxu0
    %v846 = vadd.f32 %v68, %v845
    %847 = vmatmul.f32.gmra.mxu0 %v759
    %v848 = vpop.f32.mrf.mxu0
    %v849 = vadd.f32 %v70, %v848
    %850 = vmatmul.f32.gmra.mxu0 %v762
    %v851 = vpop.f32.mrf.mxu0
    %v852 = vadd.f32 %v72, %v851
    %853 = vdwg.mxu0
    %854 = vst [vmem:[#allocation5 + $0x8] sm:$0xff] %v831
    %855 = vst [vmem:[#allocation5 + $0x18] sm:$0xff] %v834
    %856 = vst [vmem:[#allocation5 + $0x28] sm:$0xff] %v837
    %857 = vst [vmem:[#allocation5 + $0x38] sm:$0xff] %v840
    %858 = vst [vmem:[#allocation5 + $0x48] sm:$0xff] %v843
    %859 = vst [vmem:[#allocation5 + $0x58] sm:$0xff] %v846
    %860 = vst [vmem:[#allocation5 + $0x68] sm:$0xff] %v849
    %861 = vst [vmem:[#allocation5 + $0x78] sm:$0xff] %v852
    %s862 = scalar_lea.vmem [#allocation2], 128
    %v863 = vld [vmem:[%s862] sm:$0xff]
    %v864 = vld [vmem:[%s862 + $0x8] sm:$0xff]
    %v865 = vld [vmem:[%s862 + $0x10] sm:$0xff]
    %v866 = vld [vmem:[%s862 + $0x18] sm:$0xff]
    %v867 = vld [vmem:[%s862 + $0x20] sm:$0xff]
    %v868 = vld [vmem:[%s862 + $0x28] sm:$0xff]
    %v869 = vld [vmem:[%s862 + $0x30] sm:$0xff]
    %v870 = vld [vmem:[%s862 + $0x38] sm:$0xff]
    %v871 = vld [vmem:[%s862 + $0x40] sm:$0xff]
    %v872 = vld [vmem:[%s862 + $0x48] sm:$0xff]
    %v873 = vld [vmem:[%s862 + $0x50] sm:$0xff]
    %v874 = vld [vmem:[%s862 + $0x58] sm:$0xff]
    %v875 = vld [vmem:[%s862 + $0x60] sm:$0xff]
    %v876 = vld [vmem:[%s862 + $0x68] sm:$0xff]
    %v877 = vld [vmem:[%s862 + $0x70] sm:$0xff]
    %v878 = vld [vmem:[%s862 + $0x78] sm:$0xff]
    %879 = vmatpush.msra.mxu0 0.0
    %880 = vmatpush.msra.mxu0 0.0
    %881 = vmatpush.msra.mxu0 0.0
    %882 = vmatpush.msra.mxu0 0.0
    %883 = vmatpush.msra.mxu0 0.0
    %884 = vmatpush.msra.mxu0 0.0
    %885 = vmatpush.msra.mxu0 0.0
    %886 = vmatpush.msra.mxu0 0.0
    %887 = vmatpush.msra.mxu0 %v877
    %888 = vmatpush.msra.mxu0 %v875
    %889 = vmatpush.msra.mxu0 %v873
    %890 = vmatpush.msra.mxu0 %v871
    %891 = vmatpush.msra.mxu0 %v869
    %892 = vmatpush.msra.mxu0 %v867
    %893 = vmatpush.msra.mxu0 %v865
    %894 = vmatpush.msra.mxu0 %v863
    %895 = vmatmul.f32.gmra.mxu0 %v75
    %v896 = vpop.f32.mrf.mxu0
    %v897 = vadd.f32 0.0, %v896
    %898 = vmatmul.f32.gmra.mxu0 %v78
    %v899 = vpop.f32.mrf.mxu0
    %v900 = vadd.f32 0.0, %v899
    %901 = vmatmul.f32.gmra.mxu0 %v81
    %v902 = vpop.f32.mrf.mxu0
    %v903 = vadd.f32 0.0, %v902
    %904 = vmatmul.f32.gmra.mxu0 %v84
    %v905 = vpop.f32.mrf.mxu0
    %v906 = vadd.f32 0.0, %v905
    %907 = vdwg.mxu0
    %908 = vmatpush.msra.mxu0 0.0
    %909 = vmatpush.msra.mxu0 0.0
    %910 = vmatpush.msra.mxu0 0.0
    %911 = vmatpush.msra.mxu0 0.0
    %912 = vmatpush.msra.mxu0 0.0
    %913 = vmatpush.msra.mxu0 0.0
    %914 = vmatpush.msra.mxu0 0.0
    %915 = vmatpush.msra.mxu0 0.0
    %916 = vmatpush.msra.mxu0 %v878
    %917 = vmatpush.msra.mxu0 %v876
    %918 = vmatpush.msra.mxu0 %v874
    %919 = vmatpush.msra.mxu0 %v872
    %920 = vmatpush.msra.mxu0 %v870
    %921 = vmatpush.msra.mxu0 %v868
    %922 = vmatpush.msra.mxu0 %v866
    %923 = vmatpush.msra.mxu0 %v864
    %924 = vmatmul.f32.gmra.mxu0 %v75
    %v925 = vpop.f32.mrf.mxu0
    %v926 = vadd.f32 0.0, %v925
    %927 = vmatmul.f32.gmra.mxu0 %v78
    %v928 = vpop.f32.mrf.mxu0
    %v929 = vadd.f32 0.0, %v928
    %930 = vmatmul.f32.gmra.mxu0 %v81
    %v931 = vpop.f32.mrf.mxu0
    %v932 = vadd.f32 0.0, %v931
    %933 = vmatmul.f32.gmra.mxu0 %v84
    %v934 = vpop.f32.mrf.mxu0
    %v935 = vadd.f32 0.0, %v934
    %936 = vdwg.mxu0
    %937 = vmatpush.msra.mxu0 0.0
    %938 = vmatpush.msra.mxu0 0.0
    %939 = vmatpush.msra.mxu0 0.0
    %940 = vmatpush.msra.mxu0 0.0
    %941 = vmatpush.msra.mxu0 0.0
    %942 = vmatpush.msra.mxu0 0.0
    %943 = vmatpush.msra.mxu0 0.0
    %944 = vmatpush.msra.mxu0 0.0
    %945 = vmatpush.msra.mxu0 %v877
    %946 = vmatpush.msra.mxu0 %v875
    %947 = vmatpush.msra.mxu0 %v873
    %948 = vmatpush.msra.mxu0 %v871
    %949 = vmatpush.msra.mxu0 %v869
    %950 = vmatpush.msra.mxu0 %v867
    %951 = vmatpush.msra.mxu0 %v865
    %952 = vmatpush.msra.mxu0 %v863
    %953 = vmatmul.f32.gmra.mxu0 %v145
    %v954 = vpop.f32.mrf.mxu0
    %v955 = vadd.f32 0.0, %v954
    %956 = vmatmul.f32.gmra.mxu0 %v148
    %v957 = vpop.f32.mrf.mxu0
    %v958 = vadd.f32 0.0, %v957
    %959 = vmatmul.f32.gmra.mxu0 %v151
    %v960 = vpop.f32.mrf.mxu0
    %v961 = vadd.f32 0.0, %v960
    %962 = vmatmul.f32.gmra.mxu0 %v154
    %v963 = vpop.f32.mrf.mxu0
    %v964 = vadd.f32 0.0, %v963
    %965 = vdwg.mxu0
    %966 = vmatpush.msra.mxu0 0.0
    %967 = vmatpush.msra.mxu0 0.0
    %968 = vmatpush.msra.mxu0 0.0
    %969 = vmatpush.msra.mxu0 0.0
    %970 = vmatpush.msra.mxu0 0.0
    %971 = vmatpush.msra.mxu0 0.0
    %972 = vmatpush.msra.mxu0 0.0
    %973 = vmatpush.msra.mxu0 0.0
    %974 = vmatpush.msra.mxu0 %v878
    %975 = vmatpush.msra.mxu0 %v876
    %976 = vmatpush.msra.mxu0 %v874
    %977 = vmatpush.msra.mxu0 %v872
    %978 = vmatpush.msra.mxu0 %v870
    %979 = vmatpush.msra.mxu0 %v868
    %980 = vmatpush.msra.mxu0 %v866
    %981 = vmatpush.msra.mxu0 %v864
    %982 = vmatmul.f32.gmra.mxu0 %v145
    %v983 = vpop.f32.mrf.mxu0
    %v984 = vadd.f32 0.0, %v983
    %985 = vmatmul.f32.gmra.mxu0 %v148
    %v986 = vpop.f32.mrf.mxu0
    %v987 = vadd.f32 0.0, %v986
    %988 = vmatmul.f32.gmra.mxu0 %v151
    %v989 = vpop.f32.mrf.mxu0
    %v990 = vadd.f32 0.0, %v989
    %991 = vmatmul.f32.gmra.mxu0 %v154
    %v992 = vpop.f32.mrf.mxu0
    %v993 = vadd.f32 0.0, %v992
    %994 = vdwg.mxu0
    %995 = vmatpush.msra.mxu0 0.0
    %996 = vmatpush.msra.mxu0 0.0
    %997 = vmatpush.msra.mxu0 0.0
    %998 = vmatpush.msra.mxu0 0.0
    %999 = vmatpush.msra.mxu0 0.0
    %1000 = vmatpush.msra.mxu0 0.0
    %1001 = vmatpush.msra.mxu0 0.0
    %1002 = vmatpush.msra.mxu0 0.0
    %1003 = vmatpush.msra.mxu0 %v877
    %1004 = vmatpush.msra.mxu0 %v875
    %1005 = vmatpush.msra.mxu0 %v873
    %1006 = vmatpush.msra.mxu0 %v871
    %1007 = vmatpush.msra.mxu0 %v869
    %1008 = vmatpush.msra.mxu0 %v867
    %1009 = vmatpush.msra.mxu0 %v865
    %1010 = vmatpush.msra.mxu0 %v863
    %1011 = vmatmul.f32.gmra.mxu0 %v215
    %v1012 = vpop.f32.mrf.mxu0
    %v1013 = vadd.f32 0.0, %v1012
    %1014 = vmatmul.f32.gmra.mxu0 %v218
    %v1015 = vpop.f32.mrf.mxu0
    %v1016 = vadd.f32 0.0, %v1015
    %1017 = vmatmul.f32.gmra.mxu0 %v221
    %v1018 = vpop.f32.mrf.mxu0
    %v1019 = vadd.f32 0.0, %v1018
    %1020 = vmatmul.f32.gmra.mxu0 %v224
    %v1021 = vpop.f32.mrf.mxu0
    %v1022 = vadd.f32 0.0, %v1021
    %1023 = vdwg.mxu0
    %1024 = vmatpush.msra.mxu0 0.0
    %1025 = vmatpush.msra.mxu0 0.0
    %1026 = vmatpush.msra.mxu0 0.0
    %1027 = vmatpush.msra.mxu0 0.0
    %1028 = vmatpush.msra.mxu0 0.0
    %1029 = vmatpush.msra.mxu0 0.0
    %1030 = vmatpush.msra.mxu0 0.0
    %1031 = vmatpush.msra.mxu0 0.0
    %1032 = vmatpush.msra.mxu0 %v878
    %1033 = vmatpush.msra.mxu0 %v876
    %1034 = vmatpush.msra.mxu0 %v874
    %1035 = vmatpush.msra.mxu0 %v872
    %1036 = vmatpush.msra.mxu0 %v870
    %1037 = vmatpush.msra.mxu0 %v868
    %1038 = vmatpush.msra.mxu0 %v866
    %1039 = vmatpush.msra.mxu0 %v864
    %1040 = vmatmul.f32.gmra.mxu0 %v215
    %v1041 = vpop.f32.mrf.mxu0
    %v1042 = vadd.f32 0.0, %v1041
    %1043 = vmatmul.f32.gmra.mxu0 %v218
    %v1044 = vpop.f32.mrf.mxu0
    %v1045 = vadd.f32 0.0, %v1044
    %1046 = vmatmul.f32.gmra.mxu0 %v221
    %v1047 = vpop.f32.mrf.mxu0
    %v1048 = vadd.f32 0.0, %v1047
    %1049 = vmatmul.f32.gmra.mxu0 %v224
    %v1050 = vpop.f32.mrf.mxu0
    %v1051 = vadd.f32 0.0, %v1050
    %1052 = vdwg.mxu0
    %1053 = vxpose.xlu0.b32.start [1/16] %v984, 128
    %1054 = vxpose.xlu0.b32.cont [2/16] %v987, 128
    %1055 = vxpose.xlu0.b32.cont [3/16] %v990, 128
    %1056 = vxpose.xlu0.b32.cont [4/16] %v993, 128
    %1057 = vxpose.xlu0.b32.cont [5/16] 0.0, 128
    %1058 = vxpose.xlu0.b32.cont [6/16] 0.0, 128
    %1059 = vxpose.xlu0.b32.cont [7/16] 0.0, 128
    %1060 = vxpose.xlu0.b32.cont [8/16] 0.0, 128
    %1061 = vxpose.xlu0.b32.cont [9/16] 0.0, 128
    %1062 = vxpose.xlu0.b32.cont [10/16] 0.0, 128
    %1063 = vxpose.xlu0.b32.cont [11/16] 0.0, 128
    %1064 = vxpose.xlu0.b32.cont [12/16] 0.0, 128
    %1065 = vxpose.xlu0.b32.cont [13/16] 0.0, 128
    %1066 = vxpose.xlu0.b32.cont [14/16] 0.0, 128
    %1067 = vxpose.xlu0.b32.cont [15/16] 0.0, 128
    %1068 = vxpose.xlu0.b32.end [16/16] 0.0, 128
    %v1069 = vpop.trf.xlu0
    %v1070 = vpop.trf.xlu0
    %v1071 = vpop.trf.xlu0
    %v1072 = vpop.trf.xlu0
    %v1073 = vpop.trf.xlu0
    %v1074 = vpop.trf.xlu0
    %v1075 = vpop.trf.xlu0
    %v1076 = vpop.trf.xlu0
    %v1077 = vpop.trf.xlu0
    %v1078 = vpop.trf.xlu0
    %v1079 = vpop.trf.xlu0
    %v1080 = vpop.trf.xlu0
    %v1081 = vpop.trf.xlu0
    %v1082 = vpop.trf.xlu0
    %v1083 = vpop.trf.xlu0
    %v1084 = vpop.trf.xlu0
    %v1086 = vsel %vm316, %v1069, 0
    %v1089 = vsel %vm316, %v1070, 0
    %v1092 = vsel %vm316, %v1071, 0
    %v1095 = vsel %vm316, %v1072, 0
    %v1098 = vsel %vm316, %v1073, 0
    %v1101 = vsel %vm316, %v1074, 0
    %v1104 = vsel %vm316, %v1075, 0
    %v1107 = vsel %vm316, %v1076, 0
    %v1110 = vsel %vm316, %v1077, 0
    %v1113 = vsel %vm316, %v1078, 0
    %v1116 = vsel %vm316, %v1079, 0
    %v1119 = vsel %vm316, %v1080, 0
    %v1122 = vsel %vm316, %v1081, 0
    %v1125 = vsel %vm316, %v1082, 0
    %v1128 = vsel %vm316, %v1083, 0
    %v1131 = vsel %vm316, %v1084, 0
    %1133 = vmatpush.msra.mxu0 0.0
    %1134 = vmatpush.msra.mxu0 0.0
    %1135 = vmatpush.msra.mxu0 0.0
    %1136 = vmatpush.msra.mxu0 0.0
    %1137 = vmatpush.msra.mxu0 0.0
    %1138 = vmatpush.msra.mxu0 0.0
    %1139 = vmatpush.msra.mxu0 0.0
    %1140 = vmatpush.msra.mxu0 0.0
    %1141 = vmatpush.msra.mxu0 0.0
    %1142 = vmatpush.msra.mxu0 0.0
    %1143 = vmatpush.msra.mxu0 0.0
    %1144 = vmatpush.msra.mxu0 0.0
    %1145 = vmatpush.msra.mxu0 %v935
    %1146 = vmatpush.msra.mxu0 %v932
    %1147 = vmatpush.msra.mxu0 %v929
    %1148 = vmatpush.msra.mxu0 %v926
    %1149 = vmatmul.f32.gmra.mxu0 %v1086
    %v1150 = vpop.f32.mrf.mxu0
    %v1151 = vadd.f32 0.0, %v1150
    %1152 = vmatmul.f32.gmra.mxu0 %v1089
    %v1153 = vpop.f32.mrf.mxu0
    %v1154 = vadd.f32 0.0, %v1153
    %1155 = vmatmul.f32.gmra.mxu0 %v1092
    %v1156 = vpop.f32.mrf.mxu0
    %v1157 = vadd.f32 0.0, %v1156
    %1158 = vmatmul.f32.gmra.mxu0 %v1095
    %v1159 = vpop.f32.mrf.mxu0
    %v1160 = vadd.f32 0.0, %v1159
    %1161 = vmatmul.f32.gmra.mxu0 %v1098
    %v1162 = vpop.f32.mrf.mxu0
    %v1163 = vadd.f32 0.0, %v1162
    %1164 = vmatmul.f32.gmra.mxu0 %v1101
    %v1165 = vpop.f32.mrf.mxu0
    %v1166 = vadd.f32 0.0, %v1165
    %1167 = vmatmul.f32.gmra.mxu0 %v1104
    %v1168 = vpop.f32.mrf.mxu0
    %v1169 = vadd.f32 0.0, %v1168
    %1170 = vmatmul.f32.gmra.mxu0 %v1107
    %v1171 = vpop.f32.mrf.mxu0
    %v1172 = vadd.f32 0.0, %v1171
    %1173 = vmatmul.f32.gmra.mxu0 %v1110
    %v1174 = vpop.f32.mrf.mxu0
    %v1175 = vadd.f32 0.0, %v1174
    %1176 = vmatmul.f32.gmra.mxu0 %v1113
    %v1177 = vpop.f32.mrf.mxu0
    %v1178 = vadd.f32 0.0, %v1177
    %1179 = vmatmul.f32.gmra.mxu0 %v1116
    %v1180 = vpop.f32.mrf.mxu0
    %v1181 = vadd.f32 0.0, %v1180
    %1182 = vmatmul.f32.gmra.mxu0 %v1119
    %v1183 = vpop.f32.mrf.mxu0
    %v1184 = vadd.f32 0.0, %v1183
    %1185 = vmatmul.f32.gmra.mxu0 %v1122
    %v1186 = vpop.f32.mrf.mxu0
    %v1187 = vadd.f32 0.0, %v1186
    %1188 = vmatmul.f32.gmra.mxu0 %v1125
    %v1189 = vpop.f32.mrf.mxu0
    %v1190 = vadd.f32 0.0, %v1189
    %1191 = vmatmul.f32.gmra.mxu0 %v1128
    %v1192 = vpop.f32.mrf.mxu0
    %v1193 = vadd.f32 0.0, %v1192
    %1194 = vmatmul.f32.gmra.mxu0 %v1131
    %v1195 = vpop.f32.mrf.mxu0
    %v1196 = vadd.f32 0.0, %v1195
    %1197 = vdwg.mxu0
    %1198 = vxpose.xlu0.b32.start [1/16] %v955, 128
    %1199 = vxpose.xlu0.b32.cont [2/16] %v958, 128
    %1200 = vxpose.xlu0.b32.cont [3/16] %v961, 128
    %1201 = vxpose.xlu0.b32.cont [4/16] %v964, 128
    %1202 = vxpose.xlu0.b32.cont [5/16] 0.0, 128
    %1203 = vxpose.xlu0.b32.cont [6/16] 0.0, 128
    %1204 = vxpose.xlu0.b32.cont [7/16] 0.0, 128
    %1205 = vxpose.xlu0.b32.cont [8/16] 0.0, 128
    %1206 = vxpose.xlu0.b32.cont [9/16] 0.0, 128
    %1207 = vxpose.xlu0.b32.cont [10/16] 0.0, 128
    %1208 = vxpose.xlu0.b32.cont [11/16] 0.0, 128
    %1209 = vxpose.xlu0.b32.cont [12/16] 0.0, 128
    %1210 = vxpose.xlu0.b32.cont [13/16] 0.0, 128
    %1211 = vxpose.xlu0.b32.cont [14/16] 0.0, 128
    %1212 = vxpose.xlu0.b32.cont [15/16] 0.0, 128
    %1213 = vxpose.xlu0.b32.end [16/16] 0.0, 128
    %v1214 = vpop.trf.xlu0
    %v1215 = vpop.trf.xlu0
    %v1216 = vpop.trf.xlu0
    %v1217 = vpop.trf.xlu0
    %v1218 = vpop.trf.xlu0
    %v1219 = vpop.trf.xlu0
    %v1220 = vpop.trf.xlu0
    %v1221 = vpop.trf.xlu0
    %v1222 = vpop.trf.xlu0
    %v1223 = vpop.trf.xlu0
    %v1224 = vpop.trf.xlu0
    %v1225 = vpop.trf.xlu0
    %v1226 = vpop.trf.xlu0
    %v1227 = vpop.trf.xlu0
    %v1228 = vpop.trf.xlu0
    %v1229 = vpop.trf.xlu0
    %v1231 = vsel %vm316, %v1214, 0
    %v1234 = vsel %vm316, %v1215, 0
    %v1237 = vsel %vm316, %v1216, 0
    %v1240 = vsel %vm316, %v1217, 0
    %v1243 = vsel %vm316, %v1218, 0
    %v1246 = vsel %vm316, %v1219, 0
    %v1249 = vsel %vm316, %v1220, 0
    %v1252 = vsel %vm316, %v1221, 0
    %v1255 = vsel %vm316, %v1222, 0
    %v1258 = vsel %vm316, %v1223, 0
    %v1261 = vsel %vm316, %v1224, 0
    %v1264 = vsel %vm316, %v1225, 0
    %v1267 = vsel %vm316, %v1226, 0
    %v1270 = vsel %vm316, %v1227, 0
    %v1273 = vsel %vm316, %v1228, 0
    %v1276 = vsel %vm316, %v1229, 0
    %1278 = vmatpush.msra.mxu0 0.0
    %1279 = vmatpush.msra.mxu0 0.0
    %1280 = vmatpush.msra.mxu0 0.0
    %1281 = vmatpush.msra.mxu0 0.0
    %1282 = vmatpush.msra.mxu0 0.0
    %1283 = vmatpush.msra.mxu0 0.0
    %1284 = vmatpush.msra.mxu0 0.0
    %1285 = vmatpush.msra.mxu0 0.0
    %1286 = vmatpush.msra.mxu0 0.0
    %1287 = vmatpush.msra.mxu0 0.0
    %1288 = vmatpush.msra.mxu0 0.0
    %1289 = vmatpush.msra.mxu0 0.0
    %1290 = vmatpush.msra.mxu0 %v906
    %1291 = vmatpush.msra.mxu0 %v903
    %1292 = vmatpush.msra.mxu0 %v900
    %1293 = vmatpush.msra.mxu0 %v897
    %1294 = vmatmul.f32.gmra.mxu0 %v1231
    %v1295 = vpop.f32.mrf.mxu0
    %v1296 = vadd.f32 %v1151, %v1295
    %1297 = vmatmul.f32.gmra.mxu0 %v1234
    %v1298 = vpop.f32.mrf.mxu0
    %v1299 = vadd.f32 %v1154, %v1298
    %1300 = vmatmul.f32.gmra.mxu0 %v1237
    %v1301 = vpop.f32.mrf.mxu0
    %v1302 = vadd.f32 %v1157, %v1301
    %1303 = vmatmul.f32.gmra.mxu0 %v1240
    %v1304 = vpop.f32.mrf.mxu0
    %v1305 = vadd.f32 %v1160, %v1304
    %1306 = vmatmul.f32.gmra.mxu0 %v1243
    %v1307 = vpop.f32.mrf.mxu0
    %v1308 = vadd.f32 %v1163, %v1307
    %1309 = vmatmul.f32.gmra.mxu0 %v1246
    %v1310 = vpop.f32.mrf.mxu0
    %v1311 = vadd.f32 %v1166, %v1310
    %1312 = vmatmul.f32.gmra.mxu0 %v1249
    %v1313 = vpop.f32.mrf.mxu0
    %v1314 = vadd.f32 %v1169, %v1313
    %1315 = vmatmul.f32.gmra.mxu0 %v1252
    %v1316 = vpop.f32.mrf.mxu0
    %v1317 = vadd.f32 %v1172, %v1316
    %1318 = vmatmul.f32.gmra.mxu0 %v1255
    %v1319 = vpop.f32.mrf.mxu0
    %v1320 = vadd.f32 %v1175, %v1319
    %1321 = vmatmul.f32.gmra.mxu0 %v1258
    %v1322 = vpop.f32.mrf.mxu0
    %v1323 = vadd.f32 %v1178, %v1322
    %1324 = vmatmul.f32.gmra.mxu0 %v1261
    %v1325 = vpop.f32.mrf.mxu0
    %v1326 = vadd.f32 %v1181, %v1325
    %1327 = vmatmul.f32.gmra.mxu0 %v1264
    %v1328 = vpop.f32.mrf.mxu0
    %v1329 = vadd.f32 %v1184, %v1328
    %1330 = vmatmul.f32.gmra.mxu0 %v1267
    %v1331 = vpop.f32.mrf.mxu0
    %v1332 = vadd.f32 %v1187, %v1331
    %1333 = vmatmul.f32.gmra.mxu0 %v1270
    %v1334 = vpop.f32.mrf.mxu0
    %v1335 = vadd.f32 %v1190, %v1334
    %1336 = vmatmul.f32.gmra.mxu0 %v1273
    %v1337 = vpop.f32.mrf.mxu0
    %v1338 = vadd.f32 %v1193, %v1337
    %1339 = vmatmul.f32.gmra.mxu0 %v1276
    %v1340 = vpop.f32.mrf.mxu0
    %v1341 = vadd.f32 %v1196, %v1340
    %1342 = vdwg.mxu0
    %v1343 = vmax.f32 %v1296, %v1308
    %v1344 = vmax.f32 %v1299, %v1311
    %v1345 = vmax.f32 %v1302, %v1314
    %v1346 = vmax.f32 %v1305, %v1317
    %v1347 = vmax.f32 %v1343, %v1320
    %v1348 = vmax.f32 %v1344, %v1323
    %v1349 = vmax.f32 %v1345, %v1326
    %v1350 = vmax.f32 %v1346, %v1329
    %v1351 = vmax.f32 %v1347, %v1332
    %v1352 = vmax.f32 %v1348, %v1335
    %v1353 = vmax.f32 %v1349, %v1338
    %v1354 = vmax.f32 %v1350, %v1341
    %v1355 = vmax.f32 %v1351, %v1352
    %v1356 = vmax.f32 %v1353, %v1354
    %v1357 = vmax.f32 %v1355, %v1356
    %v1358 = vrot.slane %v1357, 4
    %v1359 = vmax.f32 %v1357, %v1358
    %v1360 = vrot.slane %v1359, 2
    %v1361 = vmax.f32 %v1359, %v1360
    %v1362 = vrot.slane %v1361, 1
    %v1363 = vmax.f32 %v1361, %v1362
    %v1364 = vsub.f32 %v1296, %v1363
    %v1365 = vsub.f32 %v1299, %v1363
    %v1366 = vsub.f32 %v1302, %v1363
    %v1367 = vsub.f32 %v1305, %v1363
    %v1368 = vsub.f32 %v1308, %v1363
    %v1369 = vsub.f32 %v1311, %v1363
    %v1370 = vsub.f32 %v1314, %v1363
    %v1371 = vsub.f32 %v1317, %v1363
    %v1372 = vsub.f32 %v1320, %v1363
    %v1373 = vsub.f32 %v1323, %v1363
    %v1374 = vsub.f32 %v1326, %v1363
    %v1375 = vsub.f32 %v1329, %v1363
    %v1376 = vsub.f32 %v1332, %v1363
    %v1377 = vsub.f32 %v1335, %v1363
    %v1378 = vsub.f32 %v1338, %v1363
    %v1379 = vsub.f32 %v1341, %v1363
    %v1380 = vmul.f32 %v1364, 1.442695
    %v1381 = vpow.pop %v1380
    %v1382 = vmul.f32 %v1365, 1.442695
    %v1383 = vpow.pop %v1382
    %v1384 = vmul.f32 %v1366, 1.442695
    %v1385 = vpow.pop %v1384
    %v1386 = vmul.f32 %v1367, 1.442695
    %v1387 = vpow.pop %v1386
    %v1388 = vmul.f32 %v1368, 1.442695
    %v1389 = vpow.pop %v1388
    %v1390 = vmul.f32 %v1369, 1.442695
    %v1391 = vpow.pop %v1390
    %v1392 = vmul.f32 %v1370, 1.442695
    %v1393 = vpow.pop %v1392
    %v1394 = vmul.f32 %v1371, 1.442695
    %v1395 = vpow.pop %v1394
    %v1396 = vmul.f32 %v1372, 1.442695
    %v1397 = vpow.pop %v1396
    %v1398 = vmul.f32 %v1373, 1.442695
    %v1399 = vpow.pop %v1398
    %v1400 = vmul.f32 %v1374, 1.442695
    %v1401 = vpow.pop %v1400
    %v1402 = vmul.f32 %v1375, 1.442695
    %v1403 = vpow.pop %v1402
    %v1404 = vmul.f32 %v1376, 1.442695
    %v1405 = vpow.pop %v1404
    %v1406 = vmul.f32 %v1377, 1.442695
    %v1407 = vpow.pop %v1406
    %v1408 = vmul.f32 %v1378, 1.442695
    %v1409 = vpow.pop %v1408
    %v1410 = vmul.f32 %v1379, 1.442695
    %v1411 = vpow.pop %v1410
    %v1412 = vadd.f32 %v1381, %v1383
    %v1413 = vadd.f32 %v1412, %v1385
    %v1414 = vadd.f32 %v1413, %v1387
    %v1415 = vadd.f32 %v1414, %v1389
    %v1416 = vadd.f32 %v1415, %v1391
    %v1417 = vadd.f32 %v1416, %v1393
    %v1418 = vadd.f32 %v1417, %v1395
    %v1419 = vadd.f32 %v1418, %v1397
    %v1420 = vadd.f32 %v1419, %v1399
    %v1421 = vadd.f32 %v1420, %v1401
    %v1422 = vadd.f32 %v1421, %v1403
    %v1423 = vadd.f32 %v1422, %v1405
    %v1424 = vadd.f32 %v1423, %v1407
    %v1425 = vadd.f32 %v1424, %v1409
    %v1426 = vadd.f32 %v1425, %v1411
    %v1427 = vrot.slane %v1426, 4
    %v1428 = vadd.f32 %v1426, %v1427
    %v1429 = vrot.slane %v1428, 2
    %v1430 = vadd.f32 %v1428, %v1429
    %v1431 = vrot.slane %v1430, 1
    %v1432 = vadd.f32 %v1430, %v1431
    %v1433 = vrcp.pop %v1432
    %v1434 = vmul.f32 %v1381, %v1433
    %v1435 = vmul.f32 %v1383, %v1433
    %v1436 = vmul.f32 %v1385, %v1433
    %v1437 = vmul.f32 %v1387, %v1433
    %v1438 = vmul.f32 %v1389, %v1433
    %v1439 = vmul.f32 %v1391, %v1433
    %v1440 = vmul.f32 %v1393, %v1433
    %v1441 = vmul.f32 %v1395, %v1433
    %v1442 = vmul.f32 %v1397, %v1433
    %v1443 = vmul.f32 %v1399, %v1433
    %v1444 = vmul.f32 %v1401, %v1433
    %v1445 = vmul.f32 %v1403, %v1433
    %v1446 = vmul.f32 %v1405, %v1433
    %v1447 = vmul.f32 %v1407, %v1433
    %v1448 = vmul.f32 %v1409, %v1433
    %v1449 = vmul.f32 %v1411, %v1433
    %1450 = vmatpush.xpose.msra.mxu0 %v1449
    %1451 = vmatpush.xpose.msra.mxu0 %v1448
    %1452 = vmatpush.xpose.msra.mxu0 %v1447
    %1453 = vmatpush.xpose.msra.mxu0 %v1446
    %1454 = vmatpush.xpose.msra.mxu0 %v1445
    %1455 = vmatpush.xpose.msra.mxu0 %v1444
    %1456 = vmatpush.xpose.msra.mxu0 %v1443
    %1457 = vmatpush.xpose.msra.mxu0 %v1442
    %1458 = vmatpush.xpose.msra.mxu0 %v1441
    %1459 = vmatpush.xpose.msra.mxu0 %v1440
    %1460 = vmatpush.xpose.msra.mxu0 %v1439
    %1461 = vmatpush.xpose.msra.mxu0 %v1438
    %1462 = vmatpush.xpose.msra.mxu0 %v1437
    %1463 = vmatpush.xpose.msra.mxu0 %v1436
    %1464 = vmatpush.xpose.msra.mxu0 %v1435
    %1465 = vmatpush.xpose.msra.mxu0 %v1434
    %1466 = vmatmul.f32.gmra.mxu0 %v1013
    %v1467 = vpop.f32.mrf.mxu0
    %v1468 = vadd.f32 0.0, %v1467
    %1469 = vmatmul.f32.gmra.mxu0 %v1016
    %v1470 = vpop.f32.mrf.mxu0
    %v1471 = vadd.f32 0.0, %v1470
    %1472 = vmatmul.f32.gmra.mxu0 %v1019
    %v1473 = vpop.f32.mrf.mxu0
    %v1474 = vadd.f32 0.0, %v1473
    %1475 = vmatmul.f32.gmra.mxu0 %v1022
    %v1476 = vpop.f32.mrf.mxu0
    %v1477 = vadd.f32 0.0, %v1476
    %1478 = vdwg.mxu0
    %1479 = vmatpush.xpose.msra.mxu0 %v1449
    %1480 = vmatpush.xpose.msra.mxu0 %v1448
    %1481 = vmatpush.xpose.msra.mxu0 %v1447
    %1482 = vmatpush.xpose.msra.mxu0 %v1446
    %1483 = vmatpush.xpose.msra.mxu0 %v1445
    %1484 = vmatpush.xpose.msra.mxu0 %v1444
    %1485 = vmatpush.xpose.msra.mxu0 %v1443
    %1486 = vmatpush.xpose.msra.mxu0 %v1442
    %1487 = vmatpush.xpose.msra.mxu0 %v1441
    %1488 = vmatpush.xpose.msra.mxu0 %v1440
    %1489 = vmatpush.xpose.msra.mxu0 %v1439
    %1490 = vmatpush.xpose.msra.mxu0 %v1438
    %1491 = vmatpush.xpose.msra.mxu0 %v1437
    %1492 = vmatpush.xpose.msra.mxu0 %v1436
    %1493 = vmatpush.xpose.msra.mxu0 %v1435
    %1494 = vmatpush.xpose.msra.mxu0 %v1434
    %1495 = vmatmul.f32.gmra.mxu0 %v1042
    %v1496 = vpop.f32.mrf.mxu0
    %v1497 = vadd.f32 0.0, %v1496
    %1498 = vmatmul.f32.gmra.mxu0 %v1045
    %v1499 = vpop.f32.mrf.mxu0
    %v1500 = vadd.f32 0.0, %v1499
    %1501 = vmatmul.f32.gmra.mxu0 %v1048
    %v1502 = vpop.f32.mrf.mxu0
    %v1503 = vadd.f32 0.0, %v1502
    %1504 = vmatmul.f32.gmra.mxu0 %v1051
    %v1505 = vpop.f32.mrf.mxu0
    %v1506 = vadd.f32 0.0, %v1505
    %1507 = vdwg.mxu0
    %1508 = vmatpush.msra.mxu0 0.0
    %1509 = vmatpush.msra.mxu0 0.0
    %1510 = vmatpush.msra.mxu0 0.0
    %1511 = vmatpush.msra.mxu0 0.0
    %1512 = vmatpush.msra.mxu0 0.0
    %1513 = vmatpush.msra.mxu0 0.0
    %1514 = vmatpush.msra.mxu0 0.0
    %1515 = vmatpush.msra.mxu0 0.0
    %1516 = vmatpush.msra.mxu0 0.0
    %1517 = vmatpush.msra.mxu0 0.0
    %1518 = vmatpush.msra.mxu0 0.0
    %1519 = vmatpush.msra.mxu0 0.0
    %1520 = vmatpush.msra.mxu0 %v1477
    %1521 = vmatpush.msra.mxu0 %v1474
    %1522 = vmatpush.msra.mxu0 %v1471
    %1523 = vmatpush.msra.mxu0 %v1468
    %1524 = vmatmul.f32.gmra.mxu0 %v741
    %v1525 = vpop.f32.mrf.mxu0
    %v1526 = vadd.f32 %v863, %v1525
    %1527 = vmatmul.f32.gmra.mxu0 %v744
    %v1528 = vpop.f32.mrf.mxu0
    %v1529 = vadd.f32 %v865, %v1528
    %1530 = vmatmul.f32.gmra.mxu0 %v747
    %v1531 = vpop.f32.mrf.mxu0
    %v1532 = vadd.f32 %v867, %v1531
    %1533 = vmatmul.f32.gmra.mxu0 %v750
    %v1534 = vpop.f32.mrf.mxu0
    %v1535 = vadd.f32 %v869, %v1534
    %1536 = vmatmul.f32.gmra.mxu0 %v753
    %v1537 = vpop.f32.mrf.mxu0
    %v1538 = vadd.f32 %v871, %v1537
    %1539 = vmatmul.f32.gmra.mxu0 %v756
    %v1540 = vpop.f32.mrf.mxu0
    %v1541 = vadd.f32 %v873, %v1540
    %1542 = vmatmul.f32.gmra.mxu0 %v759
    %v1543 = vpop.f32.mrf.mxu0
    %v1544 = vadd.f32 %v875, %v1543
    %1545 = vmatmul.f32.gmra.mxu0 %v762
    %v1546 = vpop.f32.mrf.mxu0
    %v1547 = vadd.f32 %v877, %v1546
    %1548 = vdwg.mxu0
    %s1549 = scalar_lea.vmem [#allocation5], 128
    %1550 = vst [vmem:[%s1549] sm:$0xff] %v1526
    %1551 = vst [vmem:[%s1549 + $0x10] sm:$0xff] %v1529
    %1552 = vst [vmem:[%s1549 + $0x20] sm:$0xff] %v1532
    %1553 = vst [vmem:[%s1549 + $0x30] sm:$0xff] %v1535
    %1554 = vst [vmem:[%s1549 + $0x40] sm:$0xff] %v1538
    %1555 = vst [vmem:[%s1549 + $0x50] sm:$0xff] %v1541
    %1556 = vst [vmem:[%s1549 + $0x60] sm:$0xff] %v1544
    %1557 = vst [vmem:[%s1549 + $0x70] sm:$0xff] %v1547
    %1558 = vmatpush.msra.mxu0 0.0
    %1559 = vmatpush.msra.mxu0 0.0
    %1560 = vmatpush.msra.mxu0 0.0
    %1561 = vmatpush.msra.mxu0 0.0
    %1562 = vmatpush.msra.mxu0 0.0
    %1563 = vmatpush.msra.mxu0 0.0
    %1564 = vmatpush.msra.mxu0 0.0
    %1565 = vmatpush.msra.mxu0 0.0
    %1566 = vmatpush.msra.mxu0 0.0
    %1567 = vmatpush.msra.mxu0 0.0
    %1568 = vmatpush.msra.mxu0 0.0
    %1569 = vmatpush.msra.mxu0 0.0
    %1570 = vmatpush.msra.mxu0 %v1506
    %1571 = vmatpush.msra.mxu0 %v1503
    %1572 = vmatpush.msra.mxu0 %v1500
    %1573 = vmatpush.msra.mxu0 %v1497
    %1574 = vmatmul.f32.gmra.mxu0 %v741
    %v1575 = vpop.f32.mrf.mxu0
    %v1576 = vadd.f32 %v864, %v1575
    %1577 = vmatmul.f32.gmra.mxu0 %v744
    %v1578 = vpop.f32.mrf.mxu0
    %v1579 = vadd.f32 %v866, %v1578
    %1580 = vmatmul.f32.gmra.mxu0 %v747
    %v1581 = vpop.f32.mrf.mxu0
    %v1582 = vadd.f32 %v868, %v1581
    %1583 = vmatmul.f32.gmra.mxu0 %v750
    %v1584 = vpop.f32.mrf.mxu0
    %v1585 = vadd.f32 %v870, %v1584
    %1586 = vmatmul.f32.gmra.mxu0 %v753
    %v1587 = vpop.f32.mrf.mxu0
    %v1588 = vadd.f32 %v872, %v1587
    %1589 = vmatmul.f32.gmra.mxu0 %v756
    %v1590 = vpop.f32.mrf.mxu0
    %v1591 = vadd.f32 %v874, %v1590
    %1592 = vmatmul.f32.gmra.mxu0 %v759
    %v1593 = vpop.f32.mrf.mxu0
    %v1594 = vadd.f32 %v876, %v1593
    %1595 = vmatmul.f32.gmra.mxu0 %v762
    %v1596 = vpop.f32.mrf.mxu0
    %v1597 = vadd.f32 %v878, %v1596
    %1598 = vdwg.mxu0
    %1599 = vst [vmem:[%s1549 + $0x8] sm:$0xff] %v1576
    %1600 = vst [vmem:[%s1549 + $0x18] sm:$0xff] %v1579
    %1601 = vst [vmem:[%s1549 + $0x28] sm:$0xff] %v1582
    %1602 = vst [vmem:[%s1549 + $0x38] sm:$0xff] %v1585
    %1603 = vst [vmem:[%s1549 + $0x48] sm:$0xff] %v1588
    %1604 = vst [vmem:[%s1549 + $0x58] sm:$0xff] %v1591
    %1605 = vst [vmem:[%s1549 + $0x68] sm:$0xff] %v1594
    %1606 = vst [vmem:[%s1549 + $0x78] sm:$0xff] %v1597
    // Predicated region
    $region26: #{tpu_custom_call.1} parent=1 // pred_check
      _
    $region27: #{tpu_custom_call.1} parent=1 // pred_check_branch
      %1608 = sbr.rel (0) target = $region29
    $region28: #{tpu_custom_call.1} parent=1 // pred_region
      %1610 = vsyncadd [#allocation4], 0
      %s1611 = sshll.u32 [#allocation5], 4
      %s1612 = int_to_ptr.vmem [resolvable:$true] %s1611
      %s1613 = sshll.u32 %s5, 4
      %s1614 = int_to_ptr.hbm [resolvable:$true] %s1613
      %1619 = dma.vmem_to_hbm [thread:$0]  %s1612, 4096, %s1614, [#allocation4], 256, 256, 16
    $region29: #{tpu_custom_call.1} parent=1 // pred_fallthru
      _
    // Predicated region
    $region30: #{tpu_custom_call.1} parent=1 // pred_check
      _
    $region31: #{tpu_custom_call.1} parent=1 // pred_check_branch
      %1621 = sbr.rel (0) target = $region33
    $region32: #{tpu_custom_call.1} parent=1 // pred_region
      %1623 = dma.done [#allocation4], 4096
    $region33: #{tpu_custom_call.1} parent=1 // pred_fallthru
      _
    %1624 = vsyncpa [#allocation3], 1
    %1625 = vsyncpa [#allocation4], 1

</llo_original>
